<compile_context>
chip_gen: v7x
topology: tpu7x:2x2x1
jax: 0.10.0
libtpu: 0.0.40
codegen_flags: <defaults>
</compile_context>

<pallas_src>
import functools

import jax
import jax.numpy as jnp
from jax.experimental import pallas as pl
from jax.experimental.pallas import tpu as pltpu

LANES = 128        # lane width: W columns x CP channel lanes (zero-padded up)
CP = 8             # channel lanes per image column (all layer widths <= 8)
NPAD = 128         # class-logit lanes (lane-dense output store)
NUM_CLASSES = 10


# ----------------------------------------------------------------------------
# Fused kernel: embed input -> conv1+ReLU -> conv2 -> conv3+ReLU -> GAP -> FC
# ----------------------------------------------------------------------------
def _fused_kernel(x_ref, w1_ref, b1_ref, w2_ref, b2_ref, w3_ref, b3_ref,
                  wfc_ref, bfc_ref, out_ref, buf_a, buf_b, *, img, h):
    f32, bf16 = jnp.float32, jnp.bfloat16
    hp = h + 2                  # rows per image block (halo, image rows, halo)
    rows = img * hp             # logical slab rows handled this grid step
    rm = rows - 2               # conv output rows (slab rows 1 .. rows-2)
    zrow = jnp.zeros((1, LANES), bf16)

    # ---- embed the compact input into slab A; zero the halo rows ------------
    for i in range(img):
        base = i * hp
        buf_a[pl.ds(base, 1), :] = zrow
        buf_a[pl.ds(base + h + 1, 1), :] = zrow
        buf_a[pl.ds(base + 1, h), :] = x_ref[i]
    # slab B outer halo rows (interior halos are rewritten by every epilogue)
    buf_b[pl.ds(0, 1), :] = zrow
    buf_b[pl.ds(rows - 1, 1), :] = zrow

    def conv3x3(src, w_ref, b_ref, relu):
        # Row shift di = sublane-shifted slab slice; the banded (128,128)
        # weight contracts columns, dj taps and channels in a single matmul.
        acc = jnp.dot(src[pl.ds(0, rm), :], w_ref[0], preferred_element_type=f32)
        acc = acc + jnp.dot(src[pl.ds(1, rm), :], w_ref[1],
                            preferred_element_type=f32)
        acc = acc + jnp.dot(src[pl.ds(2, rm), :], w_ref[2],
                            preferred_element_type=f32)
        acc = acc + b_ref[...]
        return jnp.maximum(acc, 0.0) if relu else acc

    def store_act(dst, act):
        dst[pl.ds(1, rm), :] = act.astype(bf16)
        for i in range(1, img):             # re-zero interior per-image halos
            dst[pl.ds(i * hp - 1, 1), :] = zrow
            dst[pl.ds(i * hp, 1), :] = zrow

    # denoiser conv1 + ReLU (torch.no_grad(): forward math is identical)
    store_act(buf_b, conv3x3(buf_a, w1_ref, b1_ref, relu=True))
    # denoiser conv2 ("encoded", no activation)
    store_act(buf_a, conv3x3(buf_b, w2_ref, b2_ref, relu=False))
    # predictor conv + ReLU -> stays a register-resident value
    feat = conv3x3(buf_a, w3_ref, b3_ref, relu=True)              # (rm, 128) f32

    # Global average pool as a matmul with an iota-built per-image row selector
    # (no division/modulo); 1/(H*W) is folded into the classifier weight.
    img_id = jax.lax.broadcasted_iota(jnp.int32, (8, rm), 0)
    srow = jax.lax.broadcasted_iota(jnp.int32, (8, rm), 1) + 1     # slab row id
    lo = img_id * hp + 1
    sel = (srow >= lo) & (srow <= lo + (h - 1))
    pooled = jnp.dot(sel.astype(bf16), feat.astype(bf16),
                     preferred_element_type=f32)                   # (8, 128)
    logits = jnp.dot(pooled.astype(bf16), wfc_ref[...],
                     preferred_element_type=f32) + bfc_ref[...]    # (8, NPAD)
    out_ref[...] = logits


# ----------------------------------------------------------------------------
# Wrapper: weight re-layout (banded block matrices) + single pallas_call
# ----------------------------------------------------------------------------
def _banded_conv_weight(w_hwio, width):
    """(3,3,Cin,Cout) HWIO -> (3, LANES, LANES) bf16 banded block weights.

    Block [win, wout] of matrix di holds w[di, win-wout+1] when |win-wout|<=1;
    out-of-range column blocks are zero, implementing 'same' zero padding
    along the width axis inside the matmul."""
    _, _, ci, co = w_hwio.shape
    wp = jnp.pad(w_hwio.astype(jnp.float32),
                 ((0, 0), (0, 0), (0, CP - ci), (0, CP - co)))      # (3,3,CP,CP)
    mats = []
    for di in range(3):
        acc = jnp.zeros((width * CP, width * CP), jnp.float32)
        for dj in range(3):
            sel = jnp.eye(width, width, k=1 - dj, dtype=jnp.float32)
            acc = acc + jnp.kron(sel, wp[di, dj])
        mats.append(jnp.pad(acc, ((0, LANES - width * CP),
                                  (0, LANES - width * CP))))
    return jnp.stack(mats).astype(jnp.bfloat16)                    # (3,128,128)


def _conv_bias_row(b, width):
    co = b.shape[0]
    row = jnp.tile(jnp.pad(b.astype(jnp.float32), (0, CP - co)), width)
    return jnp.pad(row, (0, LANES - width * CP)).reshape(1, LANES)


def _folded_fc_weight(wfc, width, hw):
    # NOTE: 1/(H*W) is folded into the bf16 head weight; exact for power-of-2
    # H*W (the test case), otherwise a <0.5% bf16 rounding difference.
    ph, ncls = wfc.shape
    wp = jnp.pad(wfc.astype(jnp.float32), ((0, CP - ph), (0, NPAD - ncls)))
    folded = jnp.kron(jnp.ones((width, 1), jnp.float32), wp) / float(hw)
    return jnp.pad(folded, ((0, LANES - width * CP), (0, 0))).astype(jnp.bfloat16)


def _choose_img_per_step(batch):
    # Amortize per-step overhead but keep the grid >= 2 when possible (v7x TCs).
    for img in (8, 4, 2):
        if batch % img == 0 and batch // img >= 2:
            return img
    return 1


def combined_model_forward(params, x_nchw):
    x = jnp.transpose(x_nchw, (0, 2, 3, 1))                   # NCHW -> NHWC
    B, H, W, Cin = x.shape
    assert Cin <= CP and W * CP <= LANES, "layout assumes <=8 channels, W*8<=128"

    # Compact bf16 input: (B, H, W*CP) with channel lanes zero-padded.
    xp = jnp.pad(x.astype(jnp.bfloat16),
                 ((0, 0), (0, 0), (0, 0), (0, CP - Cin)))
    xr = jnp.pad(xp.reshape(B, H, W * CP),
                 ((0, 0), (0, 0), (0, LANES - W * CP)))        # (B, H, 128)

    w1 = _banded_conv_weight(params["d_conv1_w"], W)
    b1 = _conv_bias_row(params["d_conv1_b"], W)
    w2 = _banded_conv_weight(params["d_conv2_w"], W)
    b2 = _conv_bias_row(params["d_conv2_b"], W)
    w3 = _banded_conv_weight(params["p_conv_w"], W)
    b3 = _conv_bias_row(params["p_conv_b"], W)
    wfc = _folded_fc_weight(params["p_fc_w"], W, H * W)
    bfc = jnp.pad(params["p_fc_b"].astype(jnp.float32),
                  (0, NPAD - params["p_fc_b"].shape[0])).reshape(1, NPAD)

    img = _choose_img_per_step(B)
    grid = (B // img,)
    slab_alloc = ((img * (H + 2) + 15) // 16) * 16             # bf16 tile align

    kernel = functools.partial(_fused_kernel, img=img, h=H)
    const2 = lambda g: (0, 0)
    const3 = lambda g: (0, 0, 0)

    out = pl.pallas_call(
        kernel,
        out_shape=jax.ShapeDtypeStruct((B // img, 8, NPAD), jnp.float32),
        grid=grid,
        in_specs=[
            pl.BlockSpec((img, H, LANES), lambda g: (g, 0, 0)),   # compact input
            pl.BlockSpec((3, LANES, LANES), const3),              # conv1 banded w
            pl.BlockSpec((1, LANES), const2),                     # conv1 bias row
            pl.BlockSpec((3, LANES, LANES), const3),              # conv2 banded w
            pl.BlockSpec((1, LANES), const2),                     # conv2 bias row
            pl.BlockSpec((3, LANES, LANES), const3),              # conv3 banded w
            pl.BlockSpec((1, LANES), const2),                     # conv3 bias row
            pl.BlockSpec((LANES, NPAD), const2),                  # folded fc w
            pl.BlockSpec((1, NPAD), const2),                      # fc bias
        ],
        out_specs=pl.BlockSpec((None, 8, NPAD), lambda g: (g, 0, 0)),
        scratch_shapes=[pltpu.VMEM((slab_alloc, LANES), jnp.bfloat16),
                        pltpu.VMEM((slab_alloc, LANES), jnp.bfloat16)],
        compiler_params=pltpu.CompilerParams(
            dimension_semantics=("parallel",)),
    )(xr, w1, b1, w2, b2, w3, b3, wfc, bfc)

    return out[:, :img, :NUM_CLASSES].reshape(B, NUM_CLASSES)


# ----------------------------------------------------------------------------
# Params + pure-JAX reference (mirrors the kernel's bf16 operand quantisation)
# ----------------------------------------------------------------------------
def init_params(key, cin=4, d_hidden=8, p_hidden=8, num_classes=NUM_CLASSES):
    ks = jax.random.split(key, 8)
    scale = 0.1
    return {
        "d_conv1_w": scale * jax.random.normal(ks[0], (3, 3, cin, d_hidden), jnp.float32),
        "d_conv1_b": scale * jax.random.normal(ks[1], (d_hidden,), jnp.float32),
        "d_conv2_w": scale * jax.random.normal(ks[2], (3, 3, d_hidden, cin), jnp.float32),
        "d_conv2_b": scale * jax.random.normal(ks[3], (cin,), jnp.float32),
        "p_conv_w": scale * jax.random.normal(ks[4], (3, 3, cin, p_hidden), jnp.float32),
        "p_conv_b": scale * jax.random.normal(ks[5], (p_hidden,), jnp.float32),
        "p_fc_w": scale * jax.random.normal(ks[6], (p_hidden, num_classes), jnp.float32),
        "p_fc_b": scale * jax.random.normal(ks[7], (num_classes,), jnp.float32),
    }


def _reference_forward(params, x_nchw):
    f32, bf16 = jnp.float32, jnp.bfloat16
    q = lambda a: a.astype(bf16).astype(f32)
    x = jnp.transpose(x_nchw, (0, 2, 3, 1)).astype(f32)
    B, H, W, _ = x.shape

    def conv(a, w, b):
        ap = jnp.pad(q(a), ((0, 0), (1, 1), (1, 1), (0, 0)))
        wq = q(w)
        out = jnp.zeros((B, H, W, w.shape[-1]), f32)
        for i in range(3):
            for j in range(3):
                out = out + jnp.einsum("bhwc,cn->bhwn",
                                       ap[:, i:i + H, j:j + W, :], wq[i, j])
        return out + b

    h = jnp.maximum(conv(x, params["d_conv1_w"], params["d_conv1_b"]), 0.0)
    enc = conv(h, params["d_conv2_w"], params["d_conv2_b"])
    feat = jnp.maximum(conv(enc, params["p_conv_w"], params["p_conv_b"]), 0.0)
    pooled = q(jnp.mean(q(feat), axis=(1, 2)))
    return pooled @ q(params["p_fc_w"]) + params["p_fc_b"]


if __name__ == "__main__":
    key = jax.random.PRNGKey(0)
    k_param, k_x = jax.random.split(key)

    B, C, H, W = 2, 4, 16, 16
    x = jax.random.normal(k_x, (B, C, H, W), jnp.float32)
    params = init_params(k_param, cin=C)

    out = jax.jit(combined_model_forward)(params, x)
    out = jax.block_until_ready(out)
    assert out.shape == (B, NUM_CLASSES), out.shape

    ref = _reference_forward(params, x)
    assert jnp.allclose(out, ref, rtol=1e-2, atol=2e-3), \
        float(jnp.max(jnp.abs(out - ref)))

    print("KERNEL_OK")
</pallas_src>

<mosaic_0001>
module attributes {stable_mosaic.version = 11 : i64} {
  func.func @_fused_kernel(%arg0: i32, %arg1: memref<1x16x128xbf16, #tpu.memory_space<vmem>>, %arg2: memref<3x128x128xbf16, #tpu.memory_space<vmem>>, %arg3: memref<1x128xf32, #tpu.memory_space<vmem>>, %arg4: memref<3x128x128xbf16, #tpu.memory_space<vmem>>, %arg5: memref<1x128xf32, #tpu.memory_space<vmem>>, %arg6: memref<3x128x128xbf16, #tpu.memory_space<vmem>>, %arg7: memref<1x128xf32, #tpu.memory_space<vmem>>, %arg8: memref<128x128xbf16, #tpu.memory_space<vmem>>, %arg9: memref<1x128xf32, #tpu.memory_space<vmem>>, %arg10: memref<1x8x128xf32, #tpu.memory_space<vmem>>, %arg11: memref<32x128xbf16, #tpu.memory_space<vmem>>, %arg12: memref<32x128xbf16, #tpu.memory_space<vmem>>) attributes {dimension_semantics = [#tpu.dimension_semantics<parallel>], iteration_bounds = array<i64: 2>, scalar_prefetch = 0 : i64, scratch_operands = 2 : i64, tpu.core_type = #tpu.core_type<tc>, window_params = [{transform_indices = @transform_0, window_bounds = array<i64: 1, 16, 128>}, {pipeline_mode = #tpu.pipeline_mode<synchronous>, transform_indices = @transform_1, window_bounds = array<i64: 3, 128, 128>}, {pipeline_mode = #tpu.pipeline_mode<synchronous>, transform_indices = @transform_2, window_bounds = array<i64: 1, 128>}, {pipeline_mode = #tpu.pipeline_mode<synchronous>, transform_indices = @transform_3, window_bounds = array<i64: 3, 128, 128>}, {pipeline_mode = #tpu.pipeline_mode<synchronous>, transform_indices = @transform_4, window_bounds = array<i64: 1, 128>}, {pipeline_mode = #tpu.pipeline_mode<synchronous>, transform_indices = @transform_5, window_bounds = array<i64: 3, 128, 128>}, {pipeline_mode = #tpu.pipeline_mode<synchronous>, transform_indices = @transform_6, window_bounds = array<i64: 1, 128>}, {pipeline_mode = #tpu.pipeline_mode<synchronous>, transform_indices = @transform_7, window_bounds = array<i64: 128, 128>}, {pipeline_mode = #tpu.pipeline_mode<synchronous>, transform_indices = @transform_8, window_bounds = array<i64: 1, 128>}, {transform_indices = @transform_9, window_bounds = array<i64: 1, 8, 128>}]} {
    %cst = arith.constant 0.000000e+00 : bf16
    %0 = vector.broadcast %cst : bf16 to vector<1x128xbf16>
    %c0 = arith.constant 0 : index
    %c0_0 = arith.constant 0 : index
    %1 = vector.load %arg11[%c0, %c0_0] : memref<32x128xbf16, #tpu.memory_space<vmem>>, vector<1x128xbf16>
    tpu.vector_store %arg11[%c0, %c0_0], %0 {strides = array<i32>} : memref<32x128xbf16, #tpu.memory_space<vmem>>, vector<1x128xbf16>,
    %c17 = arith.constant 17 : index
    %c0_1 = arith.constant 0 : index
    %2 = vector.load %arg11[%c17, %c0_1] : memref<32x128xbf16, #tpu.memory_space<vmem>>, vector<1x128xbf16>
    tpu.vector_store %arg11[%c17, %c0_1], %0 {strides = array<i32>} : memref<32x128xbf16, #tpu.memory_space<vmem>>, vector<1x128xbf16>,
    %c0_2 = arith.constant 0 : index
    %c0_3 = arith.constant 0 : index
    %c0_4 = arith.constant 0 : index
    %3 = vector.load %arg1[%c0_2, %c0_3, %c0_4] : memref<1x16x128xbf16, #tpu.memory_space<vmem>>, vector<1x16x128xbf16>
    %4 = vector.shape_cast %3 : vector<1x16x128xbf16> to vector<16x128xbf16>
    %c1 = arith.constant 1 : index
    %c0_5 = arith.constant 0 : index
    %5 = vector.load %arg11[%c1, %c0_5] : memref<32x128xbf16, #tpu.memory_space<vmem>>, vector<16x128xbf16>
    tpu.vector_store %arg11[%c1, %c0_5], %4 {strides = array<i32>} : memref<32x128xbf16, #tpu.memory_space<vmem>>, vector<16x128xbf16>,
    %c0_6 = arith.constant 0 : index
    %c0_7 = arith.constant 0 : index
    %6 = vector.load %arg12[%c0_6, %c0_7] : memref<32x128xbf16, #tpu.memory_space<vmem>>, vector<1x128xbf16>
    tpu.vector_store %arg12[%c0_6, %c0_7], %0 {strides = array<i32>} : memref<32x128xbf16, #tpu.memory_space<vmem>>, vector<1x128xbf16>,
    %c17_8 = arith.constant 17 : index
    %c0_9 = arith.constant 0 : index
    %7 = vector.load %arg12[%c17_8, %c0_9] : memref<32x128xbf16, #tpu.memory_space<vmem>>, vector<1x128xbf16>
    tpu.vector_store %arg12[%c17_8, %c0_9], %0 {strides = array<i32>} : memref<32x128xbf16, #tpu.memory_space<vmem>>, vector<1x128xbf16>,
    %c0_10 = arith.constant 0 : index
    %c0_11 = arith.constant 0 : index
    %8 = vector.load %arg11[%c0_10, %c0_11] : memref<32x128xbf16, #tpu.memory_space<vmem>>, vector<16x128xbf16>
    %c0_12 = arith.constant 0 : index
    %c0_13 = arith.constant 0 : index
    %c0_14 = arith.constant 0 : index
    %9 = vector.load %arg2[%c0_12, %c0_13, %c0_14] : memref<3x128x128xbf16, #tpu.memory_space<vmem>>, vector<1x128x128xbf16>
    %10 = vector.shape_cast %9 : vector<1x128x128xbf16> to vector<128x128xbf16>
    %cst_15 = arith.constant dense<0.000000e+00> : vector<16x128xf32>
    %11 = tpu.matmul %8, %10, %cst_15 {dimension_numbers = #tpu.dot_dimension_numbers<[1], [0], [0], [1], [0, 0, 1, 1], [], []>} : vector<16x128xbf16>, vector<128x128xbf16>, vector<16x128xf32> -> vector<16x128xf32>
    %c1_16 = arith.constant 1 : index
    %c0_17 = arith.constant 0 : index
    %12 = vector.load %arg11[%c1_16, %c0_17] : memref<32x128xbf16, #tpu.memory_space<vmem>>, vector<16x128xbf16>
    %c1_18 = arith.constant 1 : index
    %c0_19 = arith.constant 0 : index
    %c0_20 = arith.constant 0 : index
    %13 = vector.load %arg2[%c1_18, %c0_19, %c0_20] : memref<3x128x128xbf16, #tpu.memory_space<vmem>>, vector<1x128x128xbf16>
    %14 = vector.shape_cast %13 : vector<1x128x128xbf16> to vector<128x128xbf16>
    %cst_21 = arith.constant dense<0.000000e+00> : vector<16x128xf32>
    %15 = tpu.matmul %12, %14, %cst_21 {dimension_numbers = #tpu.dot_dimension_numbers<[1], [0], [0], [1], [0, 0, 1, 1], [], []>} : vector<16x128xbf16>, vector<128x128xbf16>, vector<16x128xf32> -> vector<16x128xf32>
    %16 = arith.addf %11, %15 : vector<16x128xf32>
    %c2 = arith.constant 2 : index
    %c0_22 = arith.constant 0 : index
    %17 = vector.load %arg11[%c2, %c0_22] : memref<32x128xbf16, #tpu.memory_space<vmem>>, vector<16x128xbf16>
    %c2_23 = arith.constant 2 : index
    %c0_24 = arith.constant 0 : index
    %c0_25 = arith.constant 0 : index
    %18 = vector.load %arg2[%c2_23, %c0_24, %c0_25] : memref<3x128x128xbf16, #tpu.memory_space<vmem>>, vector<1x128x128xbf16>
    %19 = vector.shape_cast %18 : vector<1x128x128xbf16> to vector<128x128xbf16>
    %cst_26 = arith.constant dense<0.000000e+00> : vector<16x128xf32>
    %20 = tpu.matmul %17, %19, %cst_26 {dimension_numbers = #tpu.dot_dimension_numbers<[1], [0], [0], [1], [0, 0, 1, 1], [], []>} : vector<16x128xbf16>, vector<128x128xbf16>, vector<16x128xf32> -> vector<16x128xf32>
    %21 = arith.addf %16, %20 : vector<16x128xf32>
    %c0_27 = arith.constant 0 : index
    %c0_28 = arith.constant 0 : index
    %22 = vector.load %arg3[%c0_27, %c0_28] : memref<1x128xf32, #tpu.memory_space<vmem>>, vector<1x128xf32>
    %23 = vector.broadcast %22 : vector<1x128xf32> to vector<16x128xf32>
    %24 = arith.addf %21, %23 : vector<16x128xf32>
    %cst_29 = arith.constant 0.000000e+00 : f32
    %25 = vector.broadcast %cst_29 : f32 to vector<16x128xf32>
    %26 = arith.maximumf %24, %25 : vector<16x128xf32>
    %27 = arith.truncf %26 : vector<16x128xf32> to vector<16x128xbf16>
    %c1_30 = arith.constant 1 : index
    %c0_31 = arith.constant 0 : index
    %28 = vector.load %arg12[%c1_30, %c0_31] : memref<32x128xbf16, #tpu.memory_space<vmem>>, vector<16x128xbf16>
    tpu.vector_store %arg12[%c1_30, %c0_31], %27 {strides = array<i32>} : memref<32x128xbf16, #tpu.memory_space<vmem>>, vector<16x128xbf16>,
    %c0_32 = arith.constant 0 : index
    %c0_33 = arith.constant 0 : index
    %29 = vector.load %arg12[%c0_32, %c0_33] : memref<32x128xbf16, #tpu.memory_space<vmem>>, vector<16x128xbf16>
    %c0_34 = arith.constant 0 : index
    %c0_35 = arith.constant 0 : index
    %c0_36 = arith.constant 0 : index
    %30 = vector.load %arg4[%c0_34, %c0_35, %c0_36] : memref<3x128x128xbf16, #tpu.memory_space<vmem>>, vector<1x128x128xbf16>
    %31 = vector.shape_cast %30 : vector<1x128x128xbf16> to vector<128x128xbf16>
    %cst_37 = arith.constant dense<0.000000e+00> : vector<16x128xf32>
    %32 = tpu.matmul %29, %31, %cst_37 {dimension_numbers = #tpu.dot_dimension_numbers<[1], [0], [0], [1], [0, 0, 1, 1], [], []>} : vector<16x128xbf16>, vector<128x128xbf16>, vector<16x128xf32> -> vector<16x128xf32>
    %c1_38 = arith.constant 1 : index
    %c0_39 = arith.constant 0 : index
    %33 = vector.load %arg12[%c1_38, %c0_39] : memref<32x128xbf16, #tpu.memory_space<vmem>>, vector<16x128xbf16>
    %c1_40 = arith.constant 1 : index
    %c0_41 = arith.constant 0 : index
    %c0_42 = arith.constant 0 : index
    %34 = vector.load %arg4[%c1_40, %c0_41, %c0_42] : memref<3x128x128xbf16, #tpu.memory_space<vmem>>, vector<1x128x128xbf16>
    %35 = vector.shape_cast %34 : vector<1x128x128xbf16> to vector<128x128xbf16>
    %cst_43 = arith.constant dense<0.000000e+00> : vector<16x128xf32>
    %36 = tpu.matmul %33, %35, %cst_43 {dimension_numbers = #tpu.dot_dimension_numbers<[1], [0], [0], [1], [0, 0, 1, 1], [], []>} : vector<16x128xbf16>, vector<128x128xbf16>, vector<16x128xf32> -> vector<16x128xf32>
    %37 = arith.addf %32, %36 : vector<16x128xf32>
    %c2_44 = arith.constant 2 : index
    %c0_45 = arith.constant 0 : index
    %38 = vector.load %arg12[%c2_44, %c0_45] : memref<32x128xbf16, #tpu.memory_space<vmem>>, vector<16x128xbf16>
    %c2_46 = arith.constant 2 : index
    %c0_47 = arith.constant 0 : index
    %c0_48 = arith.constant 0 : index
    %39 = vector.load %arg4[%c2_46, %c0_47, %c0_48] : memref<3x128x128xbf16, #tpu.memory_space<vmem>>, vector<1x128x128xbf16>
    %40 = vector.shape_cast %39 : vector<1x128x128xbf16> to vector<128x128xbf16>
    %cst_49 = arith.constant dense<0.000000e+00> : vector<16x128xf32>
    %41 = tpu.matmul %38, %40, %cst_49 {dimension_numbers = #tpu.dot_dimension_numbers<[1], [0], [0], [1], [0, 0, 1, 1], [], []>} : vector<16x128xbf16>, vector<128x128xbf16>, vector<16x128xf32> -> vector<16x128xf32>
    %42 = arith.addf %37, %41 : vector<16x128xf32>
    %c0_50 = arith.constant 0 : index
    %c0_51 = arith.constant 0 : index
    %43 = vector.load %arg5[%c0_50, %c0_51] : memref<1x128xf32, #tpu.memory_space<vmem>>, vector<1x128xf32>
    %44 = vector.broadcast %43 : vector<1x128xf32> to vector<16x128xf32>
    %45 = arith.addf %42, %44 : vector<16x128xf32>
    %46 = arith.truncf %45 : vector<16x128xf32> to vector<16x128xbf16>
    %c1_52 = arith.constant 1 : index
    %c0_53 = arith.constant 0 : index
    %47 = vector.load %arg11[%c1_52, %c0_53] : memref<32x128xbf16, #tpu.memory_space<vmem>>, vector<16x128xbf16>
    tpu.vector_store %arg11[%c1_52, %c0_53], %46 {strides = array<i32>} : memref<32x128xbf16, #tpu.memory_space<vmem>>, vector<16x128xbf16>,
    %c0_54 = arith.constant 0 : index
    %c0_55 = arith.constant 0 : index
    %48 = vector.load %arg11[%c0_54, %c0_55] : memref<32x128xbf16, #tpu.memory_space<vmem>>, vector<16x128xbf16>
    %c0_56 = arith.constant 0 : index
    %c0_57 = arith.constant 0 : index
    %c0_58 = arith.constant 0 : index
    %49 = vector.load %arg6[%c0_56, %c0_57, %c0_58] : memref<3x128x128xbf16, #tpu.memory_space<vmem>>, vector<1x128x128xbf16>
    %50 = vector.shape_cast %49 : vector<1x128x128xbf16> to vector<128x128xbf16>
    %cst_59 = arith.constant dense<0.000000e+00> : vector<16x128xf32>
    %51 = tpu.matmul %48, %50, %cst_59 {dimension_numbers = #tpu.dot_dimension_numbers<[1], [0], [0], [1], [0, 0, 1, 1], [], []>} : vector<16x128xbf16>, vector<128x128xbf16>, vector<16x128xf32> -> vector<16x128xf32>
    %c1_60 = arith.constant 1 : index
    %c0_61 = arith.constant 0 : index
    %52 = vector.load %arg11[%c1_60, %c0_61] : memref<32x128xbf16, #tpu.memory_space<vmem>>, vector<16x128xbf16>
    %c1_62 = arith.constant 1 : index
    %c0_63 = arith.constant 0 : index
    %c0_64 = arith.constant 0 : index
    %53 = vector.load %arg6[%c1_62, %c0_63, %c0_64] : memref<3x128x128xbf16, #tpu.memory_space<vmem>>, vector<1x128x128xbf16>
    %54 = vector.shape_cast %53 : vector<1x128x128xbf16> to vector<128x128xbf16>
    %cst_65 = arith.constant dense<0.000000e+00> : vector<16x128xf32>
    %55 = tpu.matmul %52, %54, %cst_65 {dimension_numbers = #tpu.dot_dimension_numbers<[1], [0], [0], [1], [0, 0, 1, 1], [], []>} : vector<16x128xbf16>, vector<128x128xbf16>, vector<16x128xf32> -> vector<16x128xf32>
    %56 = arith.addf %51, %55 : vector<16x128xf32>
    %c2_66 = arith.constant 2 : index
    %c0_67 = arith.constant 0 : index
    %57 = vector.load %arg11[%c2_66, %c0_67] : memref<32x128xbf16, #tpu.memory_space<vmem>>, vector<16x128xbf16>
    %c2_68 = arith.constant 2 : index
    %c0_69 = arith.constant 0 : index
    %c0_70 = arith.constant 0 : index
    %58 = vector.load %arg6[%c2_68, %c0_69, %c0_70] : memref<3x128x128xbf16, #tpu.memory_space<vmem>>, vector<1x128x128xbf16>
    %59 = vector.shape_cast %58 : vector<1x128x128xbf16> to vector<128x128xbf16>
    %cst_71 = arith.constant dense<0.000000e+00> : vector<16x128xf32>
    %60 = tpu.matmul %57, %59, %cst_71 {dimension_numbers = #tpu.dot_dimension_numbers<[1], [0], [0], [1], [0, 0, 1, 1], [], []>} : vector<16x128xbf16>, vector<128x128xbf16>, vector<16x128xf32> -> vector<16x128xf32>
    %61 = arith.addf %56, %60 : vector<16x128xf32>
    %c0_72 = arith.constant 0 : index
    %c0_73 = arith.constant 0 : index
    %62 = vector.load %arg7[%c0_72, %c0_73] : memref<1x128xf32, #tpu.memory_space<vmem>>, vector<1x128xf32>
    %63 = vector.broadcast %62 : vector<1x128xf32> to vector<16x128xf32>
    %64 = arith.addf %61, %63 : vector<16x128xf32>
    %cst_74 = arith.constant 0.000000e+00 : f32
    %65 = vector.broadcast %cst_74 : f32 to vector<16x128xf32>
    %66 = arith.maximumf %64, %65 : vector<16x128xf32>
    %67 = tpu.iota {dimensions = array<i32: 0>} : vector<8x16xi32>
    %68 = tpu.iota {dimensions = array<i32: 1>} : vector<8x16xi32>
    %c1_i32 = arith.constant 1 : i32
    %69 = vector.broadcast %c1_i32 : i32 to vector<8x16xi32>
    %70 = arith.addi %68, %69 : vector<8x16xi32>
    %c18_i32 = arith.constant 18 : i32
    %71 = vector.broadcast %c18_i32 : i32 to vector<8x16xi32>
    %72 = arith.muli %67, %71 : vector<8x16xi32>
    %c1_i32_75 = arith.constant 1 : i32
    %73 = vector.broadcast %c1_i32_75 : i32 to vector<8x16xi32>
    %74 = arith.addi %72, %73 : vector<8x16xi32>
    %75 = arith.cmpi sge, %70, %74 : vector<8x16xi32>
    %c15_i32 = arith.constant 15 : i32
    %76 = vector.broadcast %c15_i32 : i32 to vector<8x16xi32>
    %77 = arith.addi %74, %76 : vector<8x16xi32>
    %78 = arith.cmpi sle, %70, %77 : vector<8x16xi32>
    %79 = arith.andi %75, %78 : vector<8x16xi1>
    %80 = arith.extui %79 : vector<8x16xi1> to vector<8x16xi32>
    %81 = arith.sitofp %80 : vector<8x16xi32> to vector<8x16xf32>
    %82 = arith.truncf %81 : vector<8x16xf32> to vector<8x16xbf16>
    %83 = arith.truncf %66 : vector<16x128xf32> to vector<16x128xbf16>
    %cst_76 = arith.constant dense<0.000000e+00> : vector<8x128xf32>
    %84 = tpu.matmul %82, %83, %cst_76 {dimension_numbers = #tpu.dot_dimension_numbers<[1], [0], [0], [1], [0, 0, 1, 1], [], []>} : vector<8x16xbf16>, vector<16x128xbf16>, vector<8x128xf32> -> vector<8x128xf32>
    %85 = arith.truncf %84 : vector<8x128xf32> to vector<8x128xbf16>
    %c0_77 = arith.constant 0 : index
    %c0_78 = arith.constant 0 : index
    %86 = vector.load %arg8[%c0_77, %c0_78] : memref<128x128xbf16, #tpu.memory_space<vmem>>, vector<128x128xbf16>
    %cst_79 = arith.constant dense<0.000000e+00> : vector<8x128xf32>
    %87 = tpu.matmul %85, %86, %cst_79 {dimension_numbers = #tpu.dot_dimension_numbers<[1], [0], [0], [1], [0, 0, 1, 1], [], []>} : vector<8x128xbf16>, vector<128x128xbf16>, vector<8x128xf32> -> vector<8x128xf32>
    %c0_80 = arith.constant 0 : index
    %c0_81 = arith.constant 0 : index
    %88 = vector.load %arg9[%c0_80, %c0_81] : memref<1x128xf32, #tpu.memory_space<vmem>>, vector<1x128xf32>
    %89 = vector.broadcast %88 : vector<1x128xf32> to vector<8x128xf32>
    %90 = arith.addf %87, %89 : vector<8x128xf32>
    %c0_82 = arith.constant 0 : index
    %c0_83 = arith.constant 0 : index
    %c0_84 = arith.constant 0 : index
    %91 = vector.load %arg10[%c0_82, %c0_83, %c0_84] : memref<1x8x128xf32, #tpu.memory_space<vmem>>, vector<1x8x128xf32>
    %92 = vector.shape_cast %91 : vector<1x8x128xf32> to vector<8x128xf32>
    %93 = vector.shape_cast %90 : vector<8x128xf32> to vector<1x8x128xf32>
    tpu.vector_store %arg10[%c0_82, %c0_83, %c0_84], %93 {strides = array<i32>} : memref<1x8x128xf32, #tpu.memory_space<vmem>>, vector<1x8x128xf32>,
    return
  }
  func.func @transform_0(%arg0: i32) -> (i32, i32, i32) {
    %c0_i32 = arith.constant 0 : i32
    %c0_i32_0 = arith.constant 0 : i32
    %c0_i32_1 = arith.constant 0 : i32
    return %arg0, %c0_i32, %c0_i32_0 : i32, i32, i32
  }
  func.func @transform_1(%arg0: i32) -> (i32, i32, i32) {
    %c0_i32 = arith.constant 0 : i32
    %c0_i32_0 = arith.constant 0 : i32
    %c0_i32_1 = arith.constant 0 : i32
    %c0_i32_2 = arith.constant 0 : i32
    return %c0_i32, %c0_i32_0, %c0_i32_1 : i32, i32, i32
  }
  func.func @transform_2(%arg0: i32) -> (i32, i32) {
    %c0_i32 = arith.constant 0 : i32
    %c0_i32_0 = arith.constant 0 : i32
    %c0_i32_1 = arith.constant 0 : i32
    return %c0_i32, %c0_i32_0 : i32, i32
  }
  func.func @transform_3(%arg0: i32) -> (i32, i32, i32) {
    %c0_i32 = arith.constant 0 : i32
    %c0_i32_0 = arith.constant 0 : i32
    %c0_i32_1 = arith.constant 0 : i32
    %c0_i32_2 = arith.constant 0 : i32
    return %c0_i32, %c0_i32_0, %c0_i32_1 : i32, i32, i32
  }
  func.func @transform_4(%arg0: i32) -> (i32, i32) {
    %c0_i32 = arith.constant 0 : i32
    %c0_i32_0 = arith.constant 0 : i32
    %c0_i32_1 = arith.constant 0 : i32
    return %c0_i32, %c0_i32_0 : i32, i32
  }
  func.func @transform_5(%arg0: i32) -> (i32, i32, i32) {
    %c0_i32 = arith.constant 0 : i32
    %c0_i32_0 = arith.constant 0 : i32
    %c0_i32_1 = arith.constant 0 : i32
    %c0_i32_2 = arith.constant 0 : i32
    return %c0_i32, %c0_i32_0, %c0_i32_1 : i32, i32, i32
  }
  func.func @transform_6(%arg0: i32) -> (i32, i32) {
    %c0_i32 = arith.constant 0 : i32
    %c0_i32_0 = arith.constant 0 : i32
    %c0_i32_1 = arith.constant 0 : i32
    return %c0_i32, %c0_i32_0 : i32, i32
  }
  func.func @transform_7(%arg0: i32) -> (i32, i32) {
    %c0_i32 = arith.constant 0 : i32
    %c0_i32_0 = arith.constant 0 : i32
    %c0_i32_1 = arith.constant 0 : i32
    return %c0_i32, %c0_i32_0 : i32, i32
  }
  func.func @transform_8(%arg0: i32) -> (i32, i32) {
    %c0_i32 = arith.constant 0 : i32
    %c0_i32_0 = arith.constant 0 : i32
    %c0_i32_1 = arith.constant 0 : i32
    return %c0_i32, %c0_i32_0 : i32, i32
  }
  func.func @transform_9(%arg0: i32) -> (i32, i32, i32) {
    %c0_i32 = arith.constant 0 : i32
    %c0_i32_0 = arith.constant 0 : i32
    %c0_i32_1 = arith.constant 0 : i32
    return %arg0, %c0_i32, %c0_i32_0 : i32, i32, i32
  }
}

</mosaic_0001>

<llo_original>
// kernel: tile.23
$region0: #{tile.23}
  #allocation0 [shape = 's32[1]{0}', space=sflag, size = 0x4, scoped, tag = 'scoped memory for tile.23']
  %s0 = inlined_call_operand.vmem [shape: f32[8], index: 0, kind: input, shape index: {}]
  %s1 = inlined_call_operand.vmem [shape: f32[16,8], index: 1, kind: output, shape index: {}]
  // Predicated region
  $region2: #{tile.23} parent=0 // pred_check
    _
  $region3: #{tile.23} parent=0 // pred_check_branch
    %3 = sbr.rel (0) target = $region5
  $region4: #{tile.23} parent=0 // pred_region
    _
  $region5: #{tile.23} parent=0 // pred_fallthru
    _
  %v4 = vld [vmem:[%s0] ss:$0 sm:$0xff]
  %5 = vst [vmem:[%s1] sm:$0xff] %v4
  %s6 = scalar_lea.vmem %s1, 8
  %7 = vst [vmem:[%s6] sm:$0xff] %v4

// kernel: tile.18
$region0: #{tile.18}
  #allocation2 [shape = 's32[1]{0}', space=sflag, size = 0x4, scoped, tag = 'scoped memory for tile.18']
  %s0 = inlined_call_operand.hbm [shape: f32[8], index: 0, kind: input, shape index: {}]
  %s1 = inlined_call_operand.vmem [shape: f32[16,8], index: 1, kind: output, shape index: {}]
  $region1: #{tile.18} parent=0
    #allocation0 [shape = 'u8[512]{0}', space=vmem, size = 0x400, scoped, tag = 'operand span for operand 0']
    #allocation1 [shape = 's32[1]{0}', space=sflag, size = 0x4, scoped, tag = 'scoped memory for tile.18']
    %2 = vsyncpa [#allocation1], 0
    // Predicated region
    $region2: #{tile.18} parent=1 // pred_check
      _
    $region3: #{tile.18} parent=1 // pred_check_branch
      %4 = sbr.rel (0) target = $region5
    $region4: #{tile.18} parent=1 // pred_region
      %s6 = ssub.s32 16, 16
      %7 = vsyncadd [#allocation1], %s6
      %s9 = sshll.u32 [#allocation0], 4
      %s10 = int_to_ptr.vmem [resolvable:$true] %s9
      %12 = dma.hbm_to_vmem [thread:$0]  %s0, 16, %s10, [#allocation1]
    $region5: #{tile.18} parent=1 // pred_fallthru
      _
    // Predicated region
    $region6: #{tile.18} parent=1 // pred_check
      _
    $region7: #{tile.18} parent=1 // pred_check_branch
      %14 = sbr.rel (0) target = $region9
    $region8: #{tile.18} parent=1 // pred_region
      %15 = dma.done [#allocation1], 16
    $region9: #{tile.18} parent=1 // pred_fallthru
      _
    %v16 = vld [vmem:[#allocation0] ss:$0 sm:$0xff]
    %17 = vst [vmem:[%s1] sm:$0xff] %v16
    %s18 = scalar_lea.vmem %s1, 8
    %19 = vst [vmem:[%s18] sm:$0xff] %v16
    %20 = vsyncpa [#allocation1], 1

// kernel: combined_model_forward.1
$region0: #{combined_model_forward.1}
  #allocation0 [shape = 'u32[]', space=smem, size = 0x4, offset = 0x4, fixed_abs, tag = 'smem constant byte address 0x4 - core index']
  #allocation1 [shape = 'u32[144,128]{1,0:T(1,128)}', space=vmem, size = 0x12000, scoped, tag = 'internal scratch']
  #allocation2 [shape = 'bf16[32,128]{1,0:T(16,128)(2,1)}', space=vmem, size = 0x2000, scoped, tag = 'scratch operand']
  #allocation3 [shape = 'bf16[32,128]{1,0:T(16,128)(2,1)}', space=vmem, size = 0x2000, scoped, tag = 'scratch operand']
  %s0 = inlined_call_operand.vmem [shape: bf16[2,16,128], index: 0, kind: input, shape index: {}]
  %s1 = inlined_call_operand.vmem [shape: bf16[3,128,128], index: 1, kind: input, shape index: {}]
  %s2 = inlined_call_operand.vmem [shape: f32[1,128], index: 2, kind: input, shape index: {}]
  %s3 = inlined_call_operand.vmem [shape: bf16[3,128,128], index: 3, kind: input, shape index: {}]
  %s4 = inlined_call_operand.vmem [shape: f32[1,128], index: 4, kind: input, shape index: {}]
  %s5 = inlined_call_operand.vmem [shape: bf16[3,128,128], index: 5, kind: input, shape index: {}]
  %s6 = inlined_call_operand.vmem [shape: f32[1,128], index: 6, kind: input, shape index: {}]
  %s7 = inlined_call_operand.vmem [shape: bf16[128,128], index: 7, kind: input, shape index: {}]
  %s8 = inlined_call_operand.vmem [shape: f32[1,128], index: 8, kind: input, shape index: {}]
  %s9 = inlined_call_operand.vmem [shape: f32[2,8,128], index: 9, kind: output, shape index: {}]
  %s10 = sld [smem:[#allocation0]]
  $region69: #{combined_model_forward.1} parent=0
    _
  %s12 = ssub.s32 1, %s10
  %s13 = scalar_select 0, %s12, %s10
  loop: start=0, step=1, limit=4
  $region2: #{combined_model_forward.1} parent=0 // loop_pre_header
    _
  $region3: #{combined_model_forward.1} parent=0 // loop_header
    %s15 = sphi 0, %s19
    %p16 = scmp.ge.s32.totalorder %s15, 4
    %s25 = sphi 0, %s27
    %s28 = sphi 0, %s25
    %s29 = sphi 0, %s28
    %s45 = sphi 0, %s29
    %s49 = sphi 0, %s49
    %s51 = sphi 0, %s49
    %s52 = sphi 0, %s51
    %s66 = sphi 0, %s52
    %s70 = sphi 0, %s70
    %s72 = sphi 0, %s70
    %s73 = sphi 0, %s72
    %s87 = sphi 0, %s73
    %s91 = sphi 0, %s91
    %s93 = sphi 0, %s91
    %s94 = sphi 0, %s93
    %s108 = sphi 0, %s94
    %s112 = sphi 0, %s112
    %s114 = sphi 0, %s112
    %s115 = sphi 0, %s114
    %s129 = sphi 0, %s115
    %s133 = sphi 0, %s133
    %s135 = sphi 0, %s133
    %s136 = sphi 0, %s135
    %s150 = sphi 0, %s136
    %s154 = sphi 0, %s154
    %s156 = sphi 0, %s154
    %s157 = sphi 0, %s156
    %s171 = sphi 0, %s157
    %s175 = sphi 0, %s175
    %s177 = sphi 0, %s175
    %s178 = sphi 0, %s177
    %s192 = sphi 0, %s178
    %s196 = sphi 0, %s196
    %s198 = sphi 0, %s196
    %s199 = sphi 0, %s198
    %s213 = sphi 0, %s199
    %s219 = sphi 0, %s221
    %s222 = sphi 0, %s219
    %s223 = sphi 0, %s222
    %s239 = sphi 0, %s223
  $region4: #{combined_model_forward.1} parent=0 // loop_header_branch
    %18 = sbr.rel (%p16) target = $region8
  $region5: #{combined_model_forward.1} parent=0 // loop_body
    %s20 = ssub.s32 %s15, 1
    %s21 = ssub.s32 %s15, 2
    %s22 = sadd.s32 %s15, 1
    %s23 = ssub.s32 %s15, %s22
    %p24 = scmp.eq.s32.totalorder %s23, 0
    %s26 = sadd.s32 %s25, 1
    %s27 = scalar_select %p24, %s25, %s26
    %p30 = pneg %p24
    %p31 = scmp.eq.s32.totalorder %s15, 1
    %p32 = por %p30, %p31
    %p33 = scmp.ne.s32.totalorder %s25, %s28
    %p34 = scmp.eq.s32.totalorder %s15, 0
    %p35 = por %p33, %p34
    %p36 = scmp.ne.s32.totalorder %s25, %s28
    %p37 = scmp.eq.s32.totalorder %s20, 1
    %p38 = por %p36, %p37
    %p39 = scmp.ne.s32.totalorder %s28, %s29
    %p40 = scmp.eq.s32.totalorder %s20, 0
    %p41 = por %p39, %p40
    %p42 = scmp.ne.s32.totalorder %s28, %s29
    %p43 = scmp.eq.s32.totalorder %s21, 1
    %p44 = por %p42, %p43
    %p46 = scmp.ne.s32.totalorder %s29, %s45
    %p47 = scmp.eq.s32.totalorder %s21, 0
    %p48 = por %p46, %p47
    %s50 = sadd.s32 %s49, 1
    %p53 = scmp.eq.s32.totalorder %s15, 1
    %p54 = scmp.ne.s32.totalorder %s49, %s51
    %p55 = scmp.eq.s32.totalorder %s15, 0
    %p56 = por %p54, %p55
    %p57 = scmp.ne.s32.totalorder %s49, %s51
    %p58 = scmp.eq.s32.totalorder %s20, 1
    %p59 = por %p57, %p58
    %p60 = scmp.ne.s32.totalorder %s51, %s52
    %p61 = scmp.eq.s32.totalorder %s20, 0
    %p62 = por %p60, %p61
    %p63 = scmp.ne.s32.totalorder %s51, %s52
    %p64 = scmp.eq.s32.totalorder %s21, 1
    %p65 = por %p63, %p64
    %p67 = scmp.ne.s32.totalorder %s52, %s66
    %p68 = scmp.eq.s32.totalorder %s21, 0
    %p69 = por %p67, %p68
    %s71 = sadd.s32 %s70, 1
    %p74 = scmp.eq.s32.totalorder %s15, 1
    %p75 = scmp.ne.s32.totalorder %s70, %s72
    %p76 = scmp.eq.s32.totalorder %s15, 0
    %p77 = por %p75, %p76
    %p78 = scmp.ne.s32.totalorder %s70, %s72
    %p79 = scmp.eq.s32.totalorder %s20, 1
    %p80 = por %p78, %p79
    %p81 = scmp.ne.s32.totalorder %s72, %s73
    %p82 = scmp.eq.s32.totalorder %s20, 0
    %p83 = por %p81, %p82
    %p84 = scmp.ne.s32.totalorder %s72, %s73
    %p85 = scmp.eq.s32.totalorder %s21, 1
    %p86 = por %p84, %p85
    %p88 = scmp.ne.s32.totalorder %s73, %s87
    %p89 = scmp.eq.s32.totalorder %s21, 0
    %p90 = por %p88, %p89
    %s92 = sadd.s32 %s91, 1
    %p95 = scmp.eq.s32.totalorder %s15, 1
    %p96 = scmp.ne.s32.totalorder %s91, %s93
    %p97 = scmp.eq.s32.totalorder %s15, 0
    %p98 = por %p96, %p97
    %p99 = scmp.ne.s32.totalorder %s91, %s93
    %p100 = scmp.eq.s32.totalorder %s20, 1
    %p101 = por %p99, %p100
    %p102 = scmp.ne.s32.totalorder %s93, %s94
    %p103 = scmp.eq.s32.totalorder %s20, 0
    %p104 = por %p102, %p103
    %p105 = scmp.ne.s32.totalorder %s93, %s94
    %p106 = scmp.eq.s32.totalorder %s21, 1
    %p107 = por %p105, %p106
    %p109 = scmp.ne.s32.totalorder %s94, %s108
    %p110 = scmp.eq.s32.totalorder %s21, 0
    %p111 = por %p109, %p110
    %s113 = sadd.s32 %s112, 1
    %p116 = scmp.eq.s32.totalorder %s15, 1
    %p117 = scmp.ne.s32.totalorder %s112, %s114
    %p118 = scmp.eq.s32.totalorder %s15, 0
    %p119 = por %p117, %p118
    %p120 = scmp.ne.s32.totalorder %s112, %s114
    %p121 = scmp.eq.s32.totalorder %s20, 1
    %p122 = por %p120, %p121
    %p123 = scmp.ne.s32.totalorder %s114, %s115
    %p124 = scmp.eq.s32.totalorder %s20, 0
    %p125 = por %p123, %p124
    %p126 = scmp.ne.s32.totalorder %s114, %s115
    %p127 = scmp.eq.s32.totalorder %s21, 1
    %p128 = por %p126, %p127
    %p130 = scmp.ne.s32.totalorder %s115, %s129
    %p131 = scmp.eq.s32.totalorder %s21, 0
    %p132 = por %p130, %p131
    %s134 = sadd.s32 %s133, 1
    %p137 = scmp.eq.s32.totalorder %s15, 1
    %p138 = scmp.ne.s32.totalorder %s133, %s135
    %p139 = scmp.eq.s32.totalorder %s15, 0
    %p140 = por %p138, %p139
    %p141 = scmp.ne.s32.totalorder %s133, %s135
    %p142 = scmp.eq.s32.totalorder %s20, 1
    %p143 = por %p141, %p142
    %p144 = scmp.ne.s32.totalorder %s135, %s136
    %p145 = scmp.eq.s32.totalorder %s20, 0
    %p146 = por %p144, %p145
    %p147 = scmp.ne.s32.totalorder %s135, %s136
    %p148 = scmp.eq.s32.totalorder %s21, 1
    %p149 = por %p147, %p148
    %p151 = scmp.ne.s32.totalorder %s136, %s150
    %p152 = scmp.eq.s32.totalorder %s21, 0
    %p153 = por %p151, %p152
    %s155 = sadd.s32 %s154, 1
    %p158 = scmp.eq.s32.totalorder %s15, 1
    %p159 = scmp.ne.s32.totalorder %s154, %s156
    %p160 = scmp.eq.s32.totalorder %s15, 0
    %p161 = por %p159, %p160
    %p162 = scmp.ne.s32.totalorder %s154, %s156
    %p163 = scmp.eq.s32.totalorder %s20, 1
    %p164 = por %p162, %p163
    %p165 = scmp.ne.s32.totalorder %s156, %s157
    %p166 = scmp.eq.s32.totalorder %s20, 0
    %p167 = por %p165, %p166
    %p168 = scmp.ne.s32.totalorder %s156, %s157
    %p169 = scmp.eq.s32.totalorder %s21, 1
    %p170 = por %p168, %p169
    %p172 = scmp.ne.s32.totalorder %s157, %s171
    %p173 = scmp.eq.s32.totalorder %s21, 0
    %p174 = por %p172, %p173
    %s176 = sadd.s32 %s175, 1
    %p179 = scmp.eq.s32.totalorder %s15, 1
    %p180 = scmp.ne.s32.totalorder %s175, %s177
    %p181 = scmp.eq.s32.totalorder %s15, 0
    %p182 = por %p180, %p181
    %p183 = scmp.ne.s32.totalorder %s175, %s177
    %p184 = scmp.eq.s32.totalorder %s20, 1
    %p185 = por %p183, %p184
    %p186 = scmp.ne.s32.totalorder %s177, %s178
    %p187 = scmp.eq.s32.totalorder %s20, 0
    %p188 = por %p186, %p187
    %p189 = scmp.ne.s32.totalorder %s177, %s178
    %p190 = scmp.eq.s32.totalorder %s21, 1
    %p191 = por %p189, %p190
    %p193 = scmp.ne.s32.totalorder %s178, %s192
    %p194 = scmp.eq.s32.totalorder %s21, 0
    %p195 = por %p193, %p194
    %s197 = sadd.s32 %s196, 1
    %p200 = scmp.eq.s32.totalorder %s15, 1
    %p201 = scmp.ne.s32.totalorder %s196, %s198
    %p202 = scmp.eq.s32.totalorder %s15, 0
    %p203 = por %p201, %p202
    %p204 = scmp.ne.s32.totalorder %s196, %s198
    %p205 = scmp.eq.s32.totalorder %s20, 1
    %p206 = por %p204, %p205
    %p207 = scmp.ne.s32.totalorder %s198, %s199
    %p208 = scmp.eq.s32.totalorder %s20, 0
    %p209 = por %p207, %p208
    %p210 = scmp.ne.s32.totalorder %s198, %s199
    %p211 = scmp.eq.s32.totalorder %s21, 1
    %p212 = por %p210, %p211
    %p214 = scmp.ne.s32.totalorder %s199, %s213
    %p215 = scmp.eq.s32.totalorder %s21, 0
    %p216 = por %p214, %p215
    %s217 = ssub.s32 %s15, %s22
    %p218 = scmp.eq.s32.totalorder %s217, 0
    %s220 = sadd.s32 %s219, 1
    %s221 = scalar_select %p218, %s219, %s220
    %p224 = pneg %p218
    %p225 = scmp.eq.s32.totalorder %s15, 1
    %p226 = por %p224, %p225
    %p227 = scmp.ne.s32.totalorder %s219, %s222
    %p228 = scmp.eq.s32.totalorder %s15, 0
    %p229 = por %p227, %p228
    %p230 = scmp.ne.s32.totalorder %s219, %s222
    %p231 = scmp.eq.s32.totalorder %s20, 1
    %p232 = por %p230, %p231
    %p233 = scmp.ne.s32.totalorder %s222, %s223
    %p234 = scmp.eq.s32.totalorder %s20, 0
    %p235 = por %p233, %p234
    %p236 = scmp.ne.s32.totalorder %s222, %s223
    %p237 = scmp.eq.s32.totalorder %s21, 1
    %p238 = por %p236, %p237
    %p240 = scmp.ne.s32.totalorder %s223, %s239
    %p241 = scmp.eq.s32.totalorder %s21, 0
    %p242 = por %p240, %p241
    %p243 = scmp.le.s32.totalorder 1, %s15
    %p244 = scmp.lt.s32.totalorder %s15, 3
    %p245 = pnand %p243, %p244
    %p246 = pneg %p245
    // Predicated region
    $region9: #{combined_model_forward.1} parent=5 // pred_check
      _
    $region10: #{combined_model_forward.1} parent=5 // pred_check_branch
      %248 = sbr.rel (%p245) target = $region12
    $region11: #{combined_model_forward.1} parent=5 // pred_region
      %s249 = ssub.s32 %s15, 1
      // Predicated region
      $region13: #{combined_model_forward.1} parent=11 // pred_check
        %p250 = pneg %p62
      $region14: #{combined_model_forward.1} parent=11 // pred_check_branch
        %252 = sbr.rel (%p250) target = $region16
      $region15: #{combined_model_forward.1} parent=11 // pred_region
        _
      $region16: #{combined_model_forward.1} parent=11 // pred_fallthru
        _
      // Predicated region
      $region17: #{combined_model_forward.1} parent=11 // pred_check
        %p253 = pneg %p83
      $region18: #{combined_model_forward.1} parent=11 // pred_check_branch
        %255 = sbr.rel (%p253) target = $region20
      $region19: #{combined_model_forward.1} parent=11 // pred_region
        _
      $region20: #{combined_model_forward.1} parent=11 // pred_fallthru
        _
      // Predicated region
      $region21: #{combined_model_forward.1} parent=11 // pred_check
        %p256 = pneg %p104
      $region22: #{combined_model_forward.1} parent=11 // pred_check_branch
        %258 = sbr.rel (%p256) target = $region24
      $region23: #{combined_model_forward.1} parent=11 // pred_region
        _
      $region24: #{combined_model_forward.1} parent=11 // pred_fallthru
        _
      // Predicated region
      $region25: #{combined_model_forward.1} parent=11 // pred_check
        %p259 = pneg %p125
      $region26: #{combined_model_forward.1} parent=11 // pred_check_branch
        %261 = sbr.rel (%p259) target = $region28
      $region27: #{combined_model_forward.1} parent=11 // pred_region
        _
      $region28: #{combined_model_forward.1} parent=11 // pred_fallthru
        _
      // Predicated region
      $region29: #{combined_model_forward.1} parent=11 // pred_check
        %p262 = pneg %p146
      $region30: #{combined_model_forward.1} parent=11 // pred_check_branch
        %264 = sbr.rel (%p262) target = $region32
      $region31: #{combined_model_forward.1} parent=11 // pred_region
        _
      $region32: #{combined_model_forward.1} parent=11 // pred_fallthru
        _
      // Predicated region
      $region33: #{combined_model_forward.1} parent=11 // pred_check
        %p265 = pneg %p167
      $region34: #{combined_model_forward.1} parent=11 // pred_check_branch
        %267 = sbr.rel (%p265) target = $region36
      $region35: #{combined_model_forward.1} parent=11 // pred_region
        _
      $region36: #{combined_model_forward.1} parent=11 // pred_fallthru
        _
      // Predicated region
      $region37: #{combined_model_forward.1} parent=11 // pred_check
        %p268 = pneg %p188
      $region38: #{combined_model_forward.1} parent=11 // pred_check_branch
        %270 = sbr.rel (%p268) target = $region40
      $region39: #{combined_model_forward.1} parent=11 // pred_region
        _
      $region40: #{combined_model_forward.1} parent=11 // pred_fallthru
        _
      // Predicated region
      $region41: #{combined_model_forward.1} parent=11 // pred_check
        %p271 = pneg %p209
      $region42: #{combined_model_forward.1} parent=11 // pred_check_branch
        %273 = sbr.rel (%p271) target = $region44
      $region43: #{combined_model_forward.1} parent=11 // pred_region
        _
      $region44: #{combined_model_forward.1} parent=11 // pred_fallthru
        _
    $region12: #{combined_model_forward.1} parent=5 // pred_fallthru
      _
    %p274 = scmp.lt.s32.totalorder %s15, 2
    // Predicated region
    $region45: #{combined_model_forward.1} parent=5 // pred_check
      %p275 = pneg %p274
    $region46: #{combined_model_forward.1} parent=5 // pred_check_branch
      %277 = sbr.rel (%p275) target = $region48
    $region47: #{combined_model_forward.1} parent=5 // pred_region
      // Predicated region
      $region49: #{combined_model_forward.1} parent=47 // pred_check
        %p278 = pneg %p35
      $region50: #{combined_model_forward.1} parent=47 // pred_check_branch
        %280 = sbr.rel (%p278) target = $region52
      $region51: #{combined_model_forward.1} parent=47 // pred_region
        %p281 = scmp.lt.s32.totalorder %s15, 1
        %s282 = scalar_select %p281, %s15, 1
        %s283 = smul.addr %s282, 2
        %s284 = smul.addr %s283, 4
        %s285 = scalar_lea.vmem %s0, %s284
      $region52: #{combined_model_forward.1} parent=47 // pred_fallthru
        _
    $region48: #{combined_model_forward.1} parent=5 // pred_fallthru
      _
    %p286 = scmp.le.s32.totalorder 1, %s15
    %p287 = scmp.lt.s32.totalorder %s15, 3
    %p288 = pnand %p286, %p287
    %p289 = pneg %p288
    // Predicated region
    $region53: #{combined_model_forward.1} parent=5 // pred_check
      _
    $region54: #{combined_model_forward.1} parent=5 // pred_check_branch
      %291 = sbr.rel (%p288) target = $region56
    $region55: #{combined_model_forward.1} parent=5 // pred_region
      %s292 = ssub.s32 %s15, 1
      %p293 = scmp.lt.s32.totalorder %s20, 1
      %s294 = scalar_select %p293, %s20, 1
      %s295 = smul.addr %s294, 2
      %s296 = smul.addr %s295, 4
      %s297 = scalar_lea.vmem %s0, %s296
      %p298 = pneg %p41
      %p299 = pneg %p38
      %p300 = pneg %p62
      %p301 = pneg %p59
      %p302 = pneg %p83
      %p303 = pneg %p80
      %p304 = pneg %p104
      %p305 = pneg %p101
      %p306 = pneg %p125
      %p307 = pneg %p122
      %p308 = pneg %p146
      %p309 = pneg %p143
      %p310 = pneg %p167
      %p311 = pneg %p164
      %p312 = pneg %p188
      %p313 = pneg %p185
      %p314 = pneg %p209
      %p315 = pneg %p206
      %p316 = pneg %p235
      %p317 = pneg %p232
      %p318 = scmp.lt.s32.totalorder %s20, 1
      %s319 = scalar_select %p318, %s20, 1
      %s320 = smul.addr %s319, 8
      %s321 = scalar_lea.vmem %s9, %s320
      %p322 = scmp.lt.s32.totalorder %s20, 1
      %s323 = scalar_select %p322, %s20, 1
      %s324 = smul.addr %s323, 2
      %s325 = smul.addr %s324, 4
      %s326 = scalar_lea.vmem %s0, %s325
      %p327 = scmp.lt.s32.totalorder %s20, 1
      %s328 = scalar_select %p327, %s20, 1
      %s329 = smul.addr %s328, 8
      %s330 = scalar_lea.vmem %s9, %s329
      %vm332 = vcmask 1040384
      %vm333 = vsmask.f32 256
      %vm334 = vmand %vm332, %vm333
      %v335 = vld [vmem:[#allocation2] sm:$0x1]
      %v336 = vsel %vm334, 0, %v335
      %337 = vst [vmem:[#allocation2] sm:$0x1] %v336
      %vm338 = vsmask.f32 7938
      %vm339 = vmand %vm332, %vm338
      %v340 = vld [vmem:[#allocation2 + $0x8] sm:$0x1]
      %v341 = vsel %vm339, 0, %v340
      %342 = vst [vmem:[#allocation2 + $0x8] sm:$0x1] %v341
      %v343 = vld [vmem:[%s326] sm:$0xf]
      %v344 = vld [vmem:[%s326 + $0x4] sm:$0xf]
      %v347 = vunpack.c.l.b16 %v343
      %v348 = vunpack.c.l.b16 %v344
      %v349 = vpack.c.b16 %v348, %v347
      %v351 = vshrl.u32 %v349, 16
      %v353 = vrot.slane %v351, 7
      %v354 = vshll.u32 %v349, 16
      %v356 = vor.u32 %v353, %v354
      %vm359 = vcmask 1047552
      %vm360 = vmand %vm359, %vm338
      %v361 = vld [vmem:[#allocation2] sm:$0xff]
      %v362 = vsel %vm360, %v356, %v361
      %363 = vst [vmem:[#allocation2] sm:$0xff] %v362
      %v364 = vld [vmem:[#allocation2 + $0x8] sm:$0x1]
      %v365 = vsel %vm334, %v353, %v364
      %366 = vst [vmem:[#allocation2 + $0x8] sm:$0x1] %v365
      %v367 = vld [vmem:[#allocation3] sm:$0x1]
      %v368 = vsel %vm334, 0, %v367
      %369 = vst [vmem:[#allocation3] sm:$0x1] %v368
      %v370 = vld [vmem:[#allocation3 + $0x8] sm:$0x1]
      %v371 = vsel %vm339, 0, %v370
      %372 = vst [vmem:[#allocation3 + $0x8] sm:$0x1] %v371
      %v373 = vld [vmem:[#allocation2] sm:$0xff]
      %v374 = vld [vmem:[%s1] sm:$0xf]
      %v375 = vld [vmem:[%s1 + $0x4] sm:$0xf]
      %v376 = vld [vmem:[%s1 + $0x8] sm:$0xf]
      %v377 = vld [vmem:[%s1 + $0xc] sm:$0xf]
      %v378 = vld [vmem:[%s1 + $0x10] sm:$0xf]
      %v379 = vld [vmem:[%s1 + $0x14] sm:$0xf]
      %v380 = vld [vmem:[%s1 + $0x18] sm:$0xf]
      %v381 = vld [vmem:[%s1 + $0x1c] sm:$0xf]
      %v382 = vld [vmem:[%s1 + $0x20] sm:$0xf]
      %v383 = vld [vmem:[%s1 + $0x24] sm:$0xf]
      %v384 = vld [vmem:[%s1 + $0x28] sm:$0xf]
      %v385 = vld [vmem:[%s1 + $0x2c] sm:$0xf]
      %v386 = vld [vmem:[%s1 + $0x30] sm:$0xf]
      %v387 = vld [vmem:[%s1 + $0x34] sm:$0xf]
      %v388 = vld [vmem:[%s1 + $0x38] sm:$0xf]
      %v389 = vld [vmem:[%s1 + $0x3c] sm:$0xf]
      %v390 = vld [vmem:[#allocation2] sm:$0xff]
      %v391 = vld [vmem:[#allocation2 + $0x8] sm:$0x1]
      %s392 = scalar_lea.vmem %s1, 64
      %v393 = vld [vmem:[%s392] sm:$0xf]
      %v394 = vld [vmem:[%s392 + $0x4] sm:$0xf]
      %v395 = vld [vmem:[%s392 + $0x8] sm:$0xf]
      %v396 = vld [vmem:[%s392 + $0xc] sm:$0xf]
      %v397 = vld [vmem:[%s392 + $0x10] sm:$0xf]
      %v398 = vld [vmem:[%s392 + $0x14] sm:$0xf]
      %v399 = vld [vmem:[%s392 + $0x18] sm:$0xf]
      %v400 = vld [vmem:[%s392 + $0x1c] sm:$0xf]
      %v401 = vld [vmem:[%s392 + $0x20] sm:$0xf]
      %v402 = vld [vmem:[%s392 + $0x24] sm:$0xf]
      %v403 = vld [vmem:[%s392 + $0x28] sm:$0xf]
      %v404 = vld [vmem:[%s392 + $0x2c] sm:$0xf]
      %v405 = vld [vmem:[%s392 + $0x30] sm:$0xf]
      %v406 = vld [vmem:[%s392 + $0x34] sm:$0xf]
      %v407 = vld [vmem:[%s392 + $0x38] sm:$0xf]
      %v408 = vld [vmem:[%s392 + $0x3c] sm:$0xf]
      %vm409 = vsmask.f32 7424
      %v411 = vshrl.u32 %v390, 16
      %v413 = vshll.u32 %v390, 16
      %v415 = vrot.slane %v413, 1
      %v416 = vor.u32 %v411, %v415
      %v418 = vshll.u32 %v391, 16
      %v420 = vrot.slane %v418, 1
      %v421 = vsel %vm409, %v416, %v420
      %v439 = vunpack.c.l.b16 %v393
      %v440 = vunpack.c.l.b16 %v394
      %v441 = vunpack.c.l.b16 %v395
      %v442 = vunpack.c.l.b16 %v396
      %v443 = vunpack.c.l.b16 %v397
      %v444 = vunpack.c.l.b16 %v398
      %v445 = vunpack.c.l.b16 %v399
      %v446 = vunpack.c.l.b16 %v400
      %v447 = vunpack.c.l.b16 %v401
      %v448 = vunpack.c.l.b16 %v402
      %v449 = vunpack.c.l.b16 %v403
      %v450 = vunpack.c.l.b16 %v404
      %v451 = vunpack.c.l.b16 %v405
      %v452 = vunpack.c.l.b16 %v406
      %v453 = vunpack.c.l.b16 %v407
      %v454 = vunpack.c.l.b16 %v408
      %v455 = vpack.c.b16 %v440, %v439
      %v456 = vpack.c.b16 %v442, %v441
      %v457 = vpack.c.b16 %v444, %v443
      %v458 = vpack.c.b16 %v446, %v445
      %v459 = vpack.c.b16 %v448, %v447
      %v460 = vpack.c.b16 %v450, %v449
      %v461 = vpack.c.b16 %v452, %v451
      %v462 = vpack.c.b16 %v454, %v453
      %471 = vmatprep.subr.bf16.mxu0 0
      %472 = vmatpush1.bf16.msra.mxu0 %v455
      %473 = vmatprep.subr.bf16.mxu0 0
      %474 = vmatpush1.bf16.msra.mxu0 %v456
      %475 = vmatprep.subr.bf16.mxu0 0
      %476 = vmatpush1.bf16.msra.mxu0 %v457
      %477 = vmatprep.subr.bf16.mxu0 0
      %478 = vmatpush1.bf16.msra.mxu0 %v458
      %479 = vmatprep.subr.bf16.mxu0 0
      %480 = vmatpush1.bf16.msra.mxu0 %v459
      %481 = vmatprep.subr.bf16.mxu0 0
      %482 = vmatpush1.bf16.msra.mxu0 %v460
      %483 = vmatprep.subr.bf16.mxu0 0
      %484 = vmatpush1.bf16.msra.mxu0 %v461
      %485 = vmatprep.subr.bf16.mxu0 0
      %486 = vmatpush1.bf16.msra.mxu0 %v462
      %487 = vmatprep.subr.bf16.mxu0 0
      %488 = vmatpush1.bf16.msra.mxu0 0
      %489 = vmatprep.subr.bf16.mxu0 0
      %490 = vmatpush1.bf16.msra.mxu0 0
      %491 = vmatprep.subr.bf16.mxu0 0
      %492 = vmatpush1.bf16.msra.mxu0 0
      %493 = vmatprep.subr.bf16.mxu0 0
      %494 = vmatpush1.bf16.msra.mxu0 0
      %495 = vmatprep.subr.bf16.mxu0 0
      %496 = vmatpush1.bf16.msra.mxu0 0
      %497 = vmatprep.subr.bf16.mxu0 0
      %498 = vmatpush1.bf16.msra.mxu0 0
      %499 = vmatprep.subr.bf16.mxu0 0
      %500 = vmatpush1.bf16.msra.mxu0 0
      %501 = vmatprep.subr.bf16.mxu0 0
      %502 = vmatpush1.bf16.msra.mxu0 0
      %503 = vmatprep.mubr.bf16.mxu0 0
      %504 = vmatmul.mubr.bf16.gmra.mrb[0].mxu0 %v421
      %v505 = vpop.f32.mrb[0].mxu0
      %v506 = vadd.f32 0.0, %v505
      %v507 = vpop.f32.mrb[0].mxu0
      %v508 = vpop.f32.mrb[0].mxu0
      %v509 = vadd.f32 0.0, %v508
      %v510 = vpop.f32.mrb[0].mxu0
      %511 = vdwg.mxu0
      %v528 = vunpack.c.l.b16 %v374
      %v529 = vunpack.c.l.b16 %v375
      %v530 = vunpack.c.l.b16 %v376
      %v531 = vunpack.c.l.b16 %v377
      %v532 = vunpack.c.l.b16 %v378
      %v533 = vunpack.c.l.b16 %v379
      %v534 = vunpack.c.l.b16 %v380
      %v535 = vunpack.c.l.b16 %v381
      %v536 = vunpack.c.l.b16 %v382
      %v537 = vunpack.c.l.b16 %v383
      %v538 = vunpack.c.l.b16 %v384
      %v539 = vunpack.c.l.b16 %v385
      %v540 = vunpack.c.l.b16 %v386
      %v541 = vunpack.c.l.b16 %v387
      %v542 = vunpack.c.l.b16 %v388
      %v543 = vunpack.c.l.b16 %v389
      %v544 = vpack.c.b16 %v529, %v528
      %v545 = vpack.c.b16 %v531, %v530
      %v546 = vpack.c.b16 %v533, %v532
      %v547 = vpack.c.b16 %v535, %v534
      %v548 = vpack.c.b16 %v537, %v536
      %v549 = vpack.c.b16 %v539, %v538
      %v550 = vpack.c.b16 %v541, %v540
      %v551 = vpack.c.b16 %v543, %v542
      %560 = vmatprep.subr.bf16.mxu0 0
      %561 = vmatpush1.bf16.msra.mxu0 %v544
      %562 = vmatprep.subr.bf16.mxu0 0
      %563 = vmatpush1.bf16.msra.mxu0 %v545
      %564 = vmatprep.subr.bf16.mxu0 0
      %565 = vmatpush1.bf16.msra.mxu0 %v546
      %566 = vmatprep.subr.bf16.mxu0 0
      %567 = vmatpush1.bf16.msra.mxu0 %v547
      %568 = vmatprep.subr.bf16.mxu0 0
      %569 = vmatpush1.bf16.msra.mxu0 %v548
      %570 = vmatprep.subr.bf16.mxu0 0
      %571 = vmatpush1.bf16.msra.mxu0 %v549
      %572 = vmatprep.subr.bf16.mxu0 0
      %573 = vmatpush1.bf16.msra.mxu0 %v550
      %574 = vmatprep.subr.bf16.mxu0 0
      %575 = vmatpush1.bf16.msra.mxu0 %v551
      %576 = vmatprep.subr.bf16.mxu0 0
      %577 = vmatpush1.bf16.msra.mxu0 0
      %578 = vmatprep.subr.bf16.mxu0 0
      %579 = vmatpush1.bf16.msra.mxu0 0
      %580 = vmatprep.subr.bf16.mxu0 0
      %581 = vmatpush1.bf16.msra.mxu0 0
      %582 = vmatprep.subr.bf16.mxu0 0
      %583 = vmatpush1.bf16.msra.mxu0 0
      %584 = vmatprep.subr.bf16.mxu0 0
      %585 = vmatpush1.bf16.msra.mxu0 0
      %586 = vmatprep.subr.bf16.mxu0 0
      %587 = vmatpush1.bf16.msra.mxu0 0
      %588 = vmatprep.subr.bf16.mxu0 0
      %589 = vmatpush1.bf16.msra.mxu0 0
      %590 = vmatprep.subr.bf16.mxu0 0
      %591 = vmatpush1.bf16.msra.mxu0 0
      %592 = vmatprep.mubr.bf16.mxu0 0
      %593 = vmatmul.mubr.bf16.gmra.mrb[0].mxu0 %v373
      %v594 = vpop.f32.mrb[0].mxu0
      %v595 = vadd.f32 %v506, %v594
      %v596 = vpop.f32.mrb[0].mxu0
      %v597 = vpop.f32.mrb[0].mxu0
      %v598 = vadd.f32 %v509, %v597
      %v599 = vpop.f32.mrb[0].mxu0
      %600 = vdwg.mxu0
      %v601 = vld [vmem:[#allocation2] sm:$0xfe]
      %s602 = scalar_lea.vmem %s1, 128
      %v603 = vld [vmem:[%s602] sm:$0xf]
      %v604 = vld [vmem:[%s602 + $0x4] sm:$0xf]
      %v605 = vld [vmem:[%s602 + $0x8] sm:$0xf]
      %v606 = vld [vmem:[%s602 + $0xc] sm:$0xf]
      %v607 = vld [vmem:[%s602 + $0x10] sm:$0xf]
      %v608 = vld [vmem:[%s602 + $0x14] sm:$0xf]
      %v609 = vld [vmem:[%s602 + $0x18] sm:$0xf]
      %v610 = vld [vmem:[%s602 + $0x1c] sm:$0xf]
      %v611 = vld [vmem:[%s602 + $0x20] sm:$0xf]
      %v612 = vld [vmem:[%s602 + $0x24] sm:$0xf]
      %v613 = vld [vmem:[%s602 + $0x28] sm:$0xf]
      %v614 = vld [vmem:[%s602 + $0x2c] sm:$0xf]
      %v615 = vld [vmem:[%s602 + $0x30] sm:$0xf]
      %v616 = vld [vmem:[%s602 + $0x34] sm:$0xf]
      %v617 = vld [vmem:[%s602 + $0x38] sm:$0xf]
      %v618 = vld [vmem:[%s602 + $0x3c] sm:$0xf]
      %vm621 = vcmask 1046528
      %v622 = vrot.slane %v601, 1
      %v623 = vrot.slane %v391, 1
      %v624 = vsel %vm621, %v622, %v623
      %v642 = vunpack.c.l.b16 %v603
      %v643 = vunpack.c.l.b16 %v604
      %v644 = vunpack.c.l.b16 %v605
      %v645 = vunpack.c.l.b16 %v606
      %v646 = vunpack.c.l.b16 %v607
      %v647 = vunpack.c.l.b16 %v608
      %v648 = vunpack.c.l.b16 %v609
      %v649 = vunpack.c.l.b16 %v610
      %v650 = vunpack.c.l.b16 %v611
      %v651 = vunpack.c.l.b16 %v612
      %v652 = vunpack.c.l.b16 %v613
      %v653 = vunpack.c.l.b16 %v614
      %v654 = vunpack.c.l.b16 %v615
      %v655 = vunpack.c.l.b16 %v616
      %v656 = vunpack.c.l.b16 %v617
      %v657 = vunpack.c.l.b16 %v618
      %v658 = vpack.c.b16 %v643, %v642
      %v659 = vpack.c.b16 %v645, %v644
      %v660 = vpack.c.b16 %v647, %v646
      %v661 = vpack.c.b16 %v649, %v648
      %v662 = vpack.c.b16 %v651, %v650
      %v663 = vpack.c.b16 %v653, %v652
      %v664 = vpack.c.b16 %v655, %v654
      %v665 = vpack.c.b16 %v657, %v656
      %674 = vmatprep.subr.bf16.mxu0 0
      %675 = vmatpush1.bf16.msra.mxu0 %v658
      %676 = vmatprep.subr.bf16.mxu0 0
      %677 = vmatpush1.bf16.msra.mxu0 %v659
      %678 = vmatprep.subr.bf16.mxu0 0
      %679 = vmatpush1.bf16.msra.mxu0 %v660
      %680 = vmatprep.subr.bf16.mxu0 0
      %681 = vmatpush1.bf16.msra.mxu0 %v661
      %682 = vmatprep.subr.bf16.mxu0 0
      %683 = vmatpush1.bf16.msra.mxu0 %v662
      %684 = vmatprep.subr.bf16.mxu0 0
      %685 = vmatpush1.bf16.msra.mxu0 %v663
      %686 = vmatprep.subr.bf16.mxu0 0
      %687 = vmatpush1.bf16.msra.mxu0 %v664
      %688 = vmatprep.subr.bf16.mxu0 0
      %689 = vmatpush1.bf16.msra.mxu0 %v665
      %690 = vmatprep.subr.bf16.mxu0 0
      %691 = vmatpush1.bf16.msra.mxu0 0
      %692 = vmatprep.subr.bf16.mxu0 0
      %693 = vmatpush1.bf16.msra.mxu0 0
      %694 = vmatprep.subr.bf16.mxu0 0
      %695 = vmatpush1.bf16.msra.mxu0 0
      %696 = vmatprep.subr.bf16.mxu0 0
      %697 = vmatpush1.bf16.msra.mxu0 0
      %698 = vmatprep.subr.bf16.mxu0 0
      %699 = vmatpush1.bf16.msra.mxu0 0
      %700 = vmatprep.subr.bf16.mxu0 0
      %701 = vmatpush1.bf16.msra.mxu0 0
      %702 = vmatprep.subr.bf16.mxu0 0
      %703 = vmatpush1.bf16.msra.mxu0 0
      %704 = vmatprep.subr.bf16.mxu0 0
      %705 = vmatpush1.bf16.msra.mxu0 0
      %706 = vmatprep.mubr.bf16.mxu0 0
      %707 = vmatmul.mubr.bf16.gmra.mrb[0].mxu0 %v624
      %v708 = vpop.f32.mrb[0].mxu0
      %v709 = vadd.f32 0.0, %v708
      %v710 = vpop.f32.mrb[0].mxu0
      %v711 = vpop.f32.mrb[0].mxu0
      %v712 = vadd.f32 0.0, %v711
      %v713 = vpop.f32.mrb[0].mxu0
      %714 = vdwg.mxu0
      %v715 = vadd.f32 %v595, %v709
      %v716 = vadd.f32 %v598, %v712
      %v717 = vld [vmem:[%s2] sm:$0x1]
      %v719 = vlaneseq
      %v720 = vshrl.u32 %v719, 7
      %v721 = vsub.s32 0, %v720
      %v722 = vrot.slane %v717, %v721
      %v724 = vadd.f32 %v715, %v722
      %v725 = vadd.f32 %v716, %v722
      %v726 = vmax.f32 %v724, 0.0
      %v727 = vmax.f32 %v725, 0.0
      %v728 = vpack.c.bf16 %v727, %v726
      %v730 = vshrl.u32 %v728, 16
      %v732 = vrot.slane %v730, 7
      %v733 = vshll.u32 %v728, 16
      %v735 = vor.u32 %v732, %v733
      %v738 = vld [vmem:[#allocation3] sm:$0xff]
      %v739 = vsel %vm360, %v735, %v738
      %740 = vst [vmem:[#allocation3] sm:$0xff] %v739
      %v741 = vld [vmem:[#allocation3 + $0x8] sm:$0x1]
      %v742 = vsel %vm334, %v732, %v741
      %743 = vst [vmem:[#allocation3 + $0x8] sm:$0x1] %v742
      %v744 = vld [vmem:[#allocation3] sm:$0xff]
      %v745 = vld [vmem:[%s3] sm:$0xf]
      %v746 = vld [vmem:[%s3 + $0x4] sm:$0xf]
      %v747 = vld [vmem:[%s3 + $0x8] sm:$0xf]
      %v748 = vld [vmem:[%s3 + $0xc] sm:$0xf]
      %v749 = vld [vmem:[%s3 + $0x10] sm:$0xf]
      %v750 = vld [vmem:[%s3 + $0x14] sm:$0xf]
      %v751 = vld [vmem:[%s3 + $0x18] sm:$0xf]
      %v752 = vld [vmem:[%s3 + $0x1c] sm:$0xf]
      %v753 = vld [vmem:[%s3 + $0x20] sm:$0xf]
      %v754 = vld [vmem:[%s3 + $0x24] sm:$0xf]
      %v755 = vld [vmem:[%s3 + $0x28] sm:$0xf]
      %v756 = vld [vmem:[%s3 + $0x2c] sm:$0xf]
      %v757 = vld [vmem:[%s3 + $0x30] sm:$0xf]
      %v758 = vld [vmem:[%s3 + $0x34] sm:$0xf]
      %v759 = vld [vmem:[%s3 + $0x38] sm:$0xf]
      %v760 = vld [vmem:[%s3 + $0x3c] sm:$0xf]
      %v761 = vld [vmem:[#allocation3] sm:$0xff]
      %v762 = vld [vmem:[#allocation3 + $0x8] sm:$0x1]
      %s763 = scalar_lea.vmem %s3, 64
      %v764 = vld [vmem:[%s763] sm:$0xf]
      %v765 = vld [vmem:[%s763 + $0x4] sm:$0xf]
      %v766 = vld [vmem:[%s763 + $0x8] sm:$0xf]
      %v767 = vld [vmem:[%s763 + $0xc] sm:$0xf]
      %v768 = vld [vmem:[%s763 + $0x10] sm:$0xf]
      %v769 = vld [vmem:[%s763 + $0x14] sm:$0xf]
      %v770 = vld [vmem:[%s763 + $0x18] sm:$0xf]
      %v771 = vld [vmem:[%s763 + $0x1c] sm:$0xf]
      %v772 = vld [vmem:[%s763 + $0x20] sm:$0xf]
      %v773 = vld [vmem:[%s763 + $0x24] sm:$0xf]
      %v774 = vld [vmem:[%s763 + $0x28] sm:$0xf]
      %v775 = vld [vmem:[%s763 + $0x2c] sm:$0xf]
      %v776 = vld [vmem:[%s763 + $0x30] sm:$0xf]
      %v777 = vld [vmem:[%s763 + $0x34] sm:$0xf]
      %v778 = vld [vmem:[%s763 + $0x38] sm:$0xf]
      %v779 = vld [vmem:[%s763 + $0x3c] sm:$0xf]
      %v781 = vshrl.u32 %v761, 16
      %v783 = vshll.u32 %v761, 16
      %v785 = vrot.slane %v783, 1
      %v786 = vor.u32 %v781, %v785
      %v788 = vshll.u32 %v762, 16
      %v790 = vrot.slane %v788, 1
      %v791 = vsel %vm409, %v786, %v790
      %v809 = vunpack.c.l.b16 %v764
      %v810 = vunpack.c.l.b16 %v765
      %v811 = vunpack.c.l.b16 %v766
      %v812 = vunpack.c.l.b16 %v767
      %v813 = vunpack.c.l.b16 %v768
      %v814 = vunpack.c.l.b16 %v769
      %v815 = vunpack.c.l.b16 %v770
      %v816 = vunpack.c.l.b16 %v771
      %v817 = vunpack.c.l.b16 %v772
      %v818 = vunpack.c.l.b16 %v773
      %v819 = vunpack.c.l.b16 %v774
      %v820 = vunpack.c.l.b16 %v775
      %v821 = vunpack.c.l.b16 %v776
      %v822 = vunpack.c.l.b16 %v777
      %v823 = vunpack.c.l.b16 %v778
      %v824 = vunpack.c.l.b16 %v779
      %v825 = vpack.c.b16 %v810, %v809
      %v826 = vpack.c.b16 %v812, %v811
      %v827 = vpack.c.b16 %v814, %v813
      %v828 = vpack.c.b16 %v816, %v815
      %v829 = vpack.c.b16 %v818, %v817
      %v830 = vpack.c.b16 %v820, %v819
      %v831 = vpack.c.b16 %v822, %v821
      %v832 = vpack.c.b16 %v824, %v823
      %841 = vmatprep.subr.bf16.mxu0 0
      %842 = vmatpush1.bf16.msra.mxu0 %v825
      %843 = vmatprep.subr.bf16.mxu0 0
      %844 = vmatpush1.bf16.msra.mxu0 %v826
      %845 = vmatprep.subr.bf16.mxu0 0
      %846 = vmatpush1.bf16.msra.mxu0 %v827
      %847 = vmatprep.subr.bf16.mxu0 0
      %848 = vmatpush1.bf16.msra.mxu0 %v828
      %849 = vmatprep.subr.bf16.mxu0 0
      %850 = vmatpush1.bf16.msra.mxu0 %v829
      %851 = vmatprep.subr.bf16.mxu0 0
      %852 = vmatpush1.bf16.msra.mxu0 %v830
      %853 = vmatprep.subr.bf16.mxu0 0
      %854 = vmatpush1.bf16.msra.mxu0 %v831
      %855 = vmatprep.subr.bf16.mxu0 0
      %856 = vmatpush1.bf16.msra.mxu0 %v832
      %857 = vmatprep.subr.bf16.mxu0 0
      %858 = vmatpush1.bf16.msra.mxu0 0
      %859 = vmatprep.subr.bf16.mxu0 0
      %860 = vmatpush1.bf16.msra.mxu0 0
      %861 = vmatprep.subr.bf16.mxu0 0
      %862 = vmatpush1.bf16.msra.mxu0 0
      %863 = vmatprep.subr.bf16.mxu0 0
      %864 = vmatpush1.bf16.msra.mxu0 0
      %865 = vmatprep.subr.bf16.mxu0 0
      %866 = vmatpush1.bf16.msra.mxu0 0
      %867 = vmatprep.subr.bf16.mxu0 0
      %868 = vmatpush1.bf16.msra.mxu0 0
      %869 = vmatprep.subr.bf16.mxu0 0
      %870 = vmatpush1.bf16.msra.mxu0 0
      %871 = vmatprep.subr.bf16.mxu0 0
      %872 = vmatpush1.bf16.msra.mxu0 0
      %873 = vmatprep.mubr.bf16.mxu0 0
      %874 = vmatmul.mubr.bf16.gmra.mrb[0].mxu0 %v791
      %v875 = vpop.f32.mrb[0].mxu0
      %v876 = vadd.f32 0.0, %v875
      %v877 = vpop.f32.mrb[0].mxu0
      %v878 = vpop.f32.mrb[0].mxu0
      %v879 = vadd.f32 0.0, %v878
      %v880 = vpop.f32.mrb[0].mxu0
      %881 = vdwg.mxu0
      %v898 = vunpack.c.l.b16 %v745
      %v899 = vunpack.c.l.b16 %v746
      %v900 = vunpack.c.l.b16 %v747
      %v901 = vunpack.c.l.b16 %v748
      %v902 = vunpack.c.l.b16 %v749
      %v903 = vunpack.c.l.b16 %v750
      %v904 = vunpack.c.l.b16 %v751
      %v905 = vunpack.c.l.b16 %v752
      %v906 = vunpack.c.l.b16 %v753
      %v907 = vunpack.c.l.b16 %v754
      %v908 = vunpack.c.l.b16 %v755
      %v909 = vunpack.c.l.b16 %v756
      %v910 = vunpack.c.l.b16 %v757
      %v911 = vunpack.c.l.b16 %v758
      %v912 = vunpack.c.l.b16 %v759
      %v913 = vunpack.c.l.b16 %v760
      %v914 = vpack.c.b16 %v899, %v898
      %v915 = vpack.c.b16 %v901, %v900
      %v916 = vpack.c.b16 %v903, %v902
      %v917 = vpack.c.b16 %v905, %v904
      %v918 = vpack.c.b16 %v907, %v906
      %v919 = vpack.c.b16 %v909, %v908
      %v920 = vpack.c.b16 %v911, %v910
      %v921 = vpack.c.b16 %v913, %v912
      %930 = vmatprep.subr.bf16.mxu0 0
      %931 = vmatpush1.bf16.msra.mxu0 %v914
      %932 = vmatprep.subr.bf16.mxu0 0
      %933 = vmatpush1.bf16.msra.mxu0 %v915
      %934 = vmatprep.subr.bf16.mxu0 0
      %935 = vmatpush1.bf16.msra.mxu0 %v916
      %936 = vmatprep.subr.bf16.mxu0 0
      %937 = vmatpush1.bf16.msra.mxu0 %v917
      %938 = vmatprep.subr.bf16.mxu0 0
      %939 = vmatpush1.bf16.msra.mxu0 %v918
      %940 = vmatprep.subr.bf16.mxu0 0
      %941 = vmatpush1.bf16.msra.mxu0 %v919
      %942 = vmatprep.subr.bf16.mxu0 0
      %943 = vmatpush1.bf16.msra.mxu0 %v920
      %944 = vmatprep.subr.bf16.mxu0 0
      %945 = vmatpush1.bf16.msra.mxu0 %v921
      %946 = vmatprep.subr.bf16.mxu0 0
      %947 = vmatpush1.bf16.msra.mxu0 0
      %948 = vmatprep.subr.bf16.mxu0 0
      %949 = vmatpush1.bf16.msra.mxu0 0
      %950 = vmatprep.subr.bf16.mxu0 0
      %951 = vmatpush1.bf16.msra.mxu0 0
      %952 = vmatprep.subr.bf16.mxu0 0
      %953 = vmatpush1.bf16.msra.mxu0 0
      %954 = vmatprep.subr.bf16.mxu0 0
      %955 = vmatpush1.bf16.msra.mxu0 0
      %956 = vmatprep.subr.bf16.mxu0 0
      %957 = vmatpush1.bf16.msra.mxu0 0
      %958 = vmatprep.subr.bf16.mxu0 0
      %959 = vmatpush1.bf16.msra.mxu0 0
      %960 = vmatprep.subr.bf16.mxu0 0
      %961 = vmatpush1.bf16.msra.mxu0 0
      %962 = vmatprep.mubr.bf16.mxu0 0
      %963 = vmatmul.mubr.bf16.gmra.mrb[0].mxu0 %v744
      %v964 = vpop.f32.mrb[0].mxu0
      %v965 = vadd.f32 %v876, %v964
      %v966 = vpop.f32.mrb[0].mxu0
      %v967 = vpop.f32.mrb[0].mxu0
      %v968 = vadd.f32 %v879, %v967
      %v969 = vpop.f32.mrb[0].mxu0
      %970 = vdwg.mxu0
      %v971 = vld [vmem:[#allocation3] sm:$0xfe]
      %s972 = scalar_lea.vmem %s3, 128
      %v973 = vld [vmem:[%s972] sm:$0xf]
      %v974 = vld [vmem:[%s972 + $0x4] sm:$0xf]
      %v975 = vld [vmem:[%s972 + $0x8] sm:$0xf]
      %v976 = vld [vmem:[%s972 + $0xc] sm:$0xf]
      %v977 = vld [vmem:[%s972 + $0x10] sm:$0xf]
      %v978 = vld [vmem:[%s972 + $0x14] sm:$0xf]
      %v979 = vld [vmem:[%s972 + $0x18] sm:$0xf]
      %v980 = vld [vmem:[%s972 + $0x1c] sm:$0xf]
      %v981 = vld [vmem:[%s972 + $0x20] sm:$0xf]
      %v982 = vld [vmem:[%s972 + $0x24] sm:$0xf]
      %v983 = vld [vmem:[%s972 + $0x28] sm:$0xf]
      %v984 = vld [vmem:[%s972 + $0x2c] sm:$0xf]
      %v985 = vld [vmem:[%s972 + $0x30] sm:$0xf]
      %v986 = vld [vmem:[%s972 + $0x34] sm:$0xf]
      %v987 = vld [vmem:[%s972 + $0x38] sm:$0xf]
      %v988 = vld [vmem:[%s972 + $0x3c] sm:$0xf]
      %v991 = vrot.slane %v971, 1
      %v992 = vrot.slane %v762, 1
      %v993 = vsel %vm621, %v991, %v992
      %v1011 = vunpack.c.l.b16 %v973
      %v1012 = vunpack.c.l.b16 %v974
      %v1013 = vunpack.c.l.b16 %v975
      %v1014 = vunpack.c.l.b16 %v976
      %v1015 = vunpack.c.l.b16 %v977
      %v1016 = vunpack.c.l.b16 %v978
      %v1017 = vunpack.c.l.b16 %v979
      %v1018 = vunpack.c.l.b16 %v980
      %v1019 = vunpack.c.l.b16 %v981
      %v1020 = vunpack.c.l.b16 %v982
      %v1021 = vunpack.c.l.b16 %v983
      %v1022 = vunpack.c.l.b16 %v984
      %v1023 = vunpack.c.l.b16 %v985
      %v1024 = vunpack.c.l.b16 %v986
      %v1025 = vunpack.c.l.b16 %v987
      %v1026 = vunpack.c.l.b16 %v988
      %v1027 = vpack.c.b16 %v1012, %v1011
      %v1028 = vpack.c.b16 %v1014, %v1013
      %v1029 = vpack.c.b16 %v1016, %v1015
      %v1030 = vpack.c.b16 %v1018, %v1017
      %v1031 = vpack.c.b16 %v1020, %v1019
      %v1032 = vpack.c.b16 %v1022, %v1021
      %v1033 = vpack.c.b16 %v1024, %v1023
      %v1034 = vpack.c.b16 %v1026, %v1025
      %1043 = vmatprep.subr.bf16.mxu0 0
      %1044 = vmatpush1.bf16.msra.mxu0 %v1027
      %1045 = vmatprep.subr.bf16.mxu0 0
      %1046 = vmatpush1.bf16.msra.mxu0 %v1028
      %1047 = vmatprep.subr.bf16.mxu0 0
      %1048 = vmatpush1.bf16.msra.mxu0 %v1029
      %1049 = vmatprep.subr.bf16.mxu0 0
      %1050 = vmatpush1.bf16.msra.mxu0 %v1030
      %1051 = vmatprep.subr.bf16.mxu0 0
      %1052 = vmatpush1.bf16.msra.mxu0 %v1031
      %1053 = vmatprep.subr.bf16.mxu0 0
      %1054 = vmatpush1.bf16.msra.mxu0 %v1032
      %1055 = vmatprep.subr.bf16.mxu0 0
      %1056 = vmatpush1.bf16.msra.mxu0 %v1033
      %1057 = vmatprep.subr.bf16.mxu0 0
      %1058 = vmatpush1.bf16.msra.mxu0 %v1034
      %1059 = vmatprep.subr.bf16.mxu0 0
      %1060 = vmatpush1.bf16.msra.mxu0 0
      %1061 = vmatprep.subr.bf16.mxu0 0
      %1062 = vmatpush1.bf16.msra.mxu0 0
      %1063 = vmatprep.subr.bf16.mxu0 0
      %1064 = vmatpush1.bf16.msra.mxu0 0
      %1065 = vmatprep.subr.bf16.mxu0 0
      %1066 = vmatpush1.bf16.msra.mxu0 0
      %1067 = vmatprep.subr.bf16.mxu0 0
      %1068 = vmatpush1.bf16.msra.mxu0 0
      %1069 = vmatprep.subr.bf16.mxu0 0
      %1070 = vmatpush1.bf16.msra.mxu0 0
      %1071 = vmatprep.subr.bf16.mxu0 0
      %1072 = vmatpush1.bf16.msra.mxu0 0
      %1073 = vmatprep.subr.bf16.mxu0 0
      %1074 = vmatpush1.bf16.msra.mxu0 0
      %1075 = vmatprep.mubr.bf16.mxu0 0
      %1076 = vmatmul.mubr.bf16.gmra.mrb[0].mxu0 %v993
      %v1077 = vpop.f32.mrb[0].mxu0
      %v1078 = vadd.f32 0.0, %v1077
      %v1079 = vpop.f32.mrb[0].mxu0
      %v1080 = vpop.f32.mrb[0].mxu0
      %v1081 = vadd.f32 0.0, %v1080
      %v1082 = vpop.f32.mrb[0].mxu0
      %1083 = vdwg.mxu0
      %v1084 = vadd.f32 %v965, %v1078
      %v1085 = vadd.f32 %v968, %v1081
      %v1086 = vld [vmem:[%s4] sm:$0x1]
      %v1088 = vlaneseq
      %v1089 = vshrl.u32 %v1088, 7
      %v1090 = vsub.s32 0, %v1089
      %v1091 = vrot.slane %v1086, %v1090
      %v1093 = vadd.f32 %v1084, %v1091
      %v1094 = vadd.f32 %v1085, %v1091
      %v1095 = vpack.c.bf16 %v1094, %v1093
      %v1097 = vshrl.u32 %v1095, 16
      %v1099 = vrot.slane %v1097, 7
      %v1100 = vshll.u32 %v1095, 16
      %v1102 = vor.u32 %v1099, %v1100
      %v1105 = vld [vmem:[#allocation2] sm:$0xff]
      %v1106 = vsel %vm360, %v1102, %v1105
      %1107 = vst [vmem:[#allocation2] sm:$0xff] %v1106
      %v1108 = vld [vmem:[#allocation2 + $0x8] sm:$0x1]
      %v1109 = vsel %vm334, %v1099, %v1108
      %1110 = vst [vmem:[#allocation2 + $0x8] sm:$0x1] %v1109
      %v1111 = vld [vmem:[#allocation2] sm:$0xff]
      %v1112 = vld [vmem:[%s5] sm:$0xf]
      %v1113 = vld [vmem:[%s5 + $0x4] sm:$0xf]
      %v1114 = vld [vmem:[%s5 + $0x8] sm:$0xf]
      %v1115 = vld [vmem:[%s5 + $0xc] sm:$0xf]
      %v1116 = vld [vmem:[%s5 + $0x10] sm:$0xf]
      %v1117 = vld [vmem:[%s5 + $0x14] sm:$0xf]
      %v1118 = vld [vmem:[%s5 + $0x18] sm:$0xf]
      %v1119 = vld [vmem:[%s5 + $0x1c] sm:$0xf]
      %v1120 = vld [vmem:[%s5 + $0x20] sm:$0xf]
      %v1121 = vld [vmem:[%s5 + $0x24] sm:$0xf]
      %v1122 = vld [vmem:[%s5 + $0x28] sm:$0xf]
      %v1123 = vld [vmem:[%s5 + $0x2c] sm:$0xf]
      %v1124 = vld [vmem:[%s5 + $0x30] sm:$0xf]
      %v1125 = vld [vmem:[%s5 + $0x34] sm:$0xf]
      %v1126 = vld [vmem:[%s5 + $0x38] sm:$0xf]
      %v1127 = vld [vmem:[%s5 + $0x3c] sm:$0xf]
      %v1128 = vld [vmem:[#allocation2] sm:$0xff]
      %v1129 = vld [vmem:[#allocation2 + $0x8] sm:$0x1]
      %s1130 = scalar_lea.vmem %s5, 64
      %v1131 = vld [vmem:[%s1130] sm:$0xf]
      %v1132 = vld [vmem:[%s1130 + $0x4] sm:$0xf]
      %v1133 = vld [vmem:[%s1130 + $0x8] sm:$0xf]
      %v1134 = vld [vmem:[%s1130 + $0xc] sm:$0xf]
      %v1135 = vld [vmem:[%s1130 + $0x10] sm:$0xf]
      %v1136 = vld [vmem:[%s1130 + $0x14] sm:$0xf]
      %v1137 = vld [vmem:[%s1130 + $0x18] sm:$0xf]
      %v1138 = vld [vmem:[%s1130 + $0x1c] sm:$0xf]
      %v1139 = vld [vmem:[%s1130 + $0x20] sm:$0xf]
      %v1140 = vld [vmem:[%s1130 + $0x24] sm:$0xf]
      %v1141 = vld [vmem:[%s1130 + $0x28] sm:$0xf]
      %v1142 = vld [vmem:[%s1130 + $0x2c] sm:$0xf]
      %v1143 = vld [vmem:[%s1130 + $0x30] sm:$0xf]
      %v1144 = vld [vmem:[%s1130 + $0x34] sm:$0xf]
      %v1145 = vld [vmem:[%s1130 + $0x38] sm:$0xf]
      %v1146 = vld [vmem:[%s1130 + $0x3c] sm:$0xf]
      %v1148 = vshrl.u32 %v1128, 16
      %v1150 = vshll.u32 %v1128, 16
      %v1152 = vrot.slane %v1150, 1
      %v1153 = vor.u32 %v1148, %v1152
      %v1155 = vshll.u32 %v1129, 16
      %v1157 = vrot.slane %v1155, 1
      %v1158 = vsel %vm409, %v1153, %v1157
      %v1176 = vunpack.c.l.b16 %v1131
      %v1177 = vunpack.c.l.b16 %v1132
      %v1178 = vunpack.c.l.b16 %v1133
      %v1179 = vunpack.c.l.b16 %v1134
      %v1180 = vunpack.c.l.b16 %v1135
      %v1181 = vunpack.c.l.b16 %v1136
      %v1182 = vunpack.c.l.b16 %v1137
      %v1183 = vunpack.c.l.b16 %v1138
      %v1184 = vunpack.c.l.b16 %v1139
      %v1185 = vunpack.c.l.b16 %v1140
      %v1186 = vunpack.c.l.b16 %v1141
      %v1187 = vunpack.c.l.b16 %v1142
      %v1188 = vunpack.c.l.b16 %v1143
      %v1189 = vunpack.c.l.b16 %v1144
      %v1190 = vunpack.c.l.b16 %v1145
      %v1191 = vunpack.c.l.b16 %v1146
      %v1192 = vpack.c.b16 %v1177, %v1176
      %v1193 = vpack.c.b16 %v1179, %v1178
      %v1194 = vpack.c.b16 %v1181, %v1180
      %v1195 = vpack.c.b16 %v1183, %v1182
      %v1196 = vpack.c.b16 %v1185, %v1184
      %v1197 = vpack.c.b16 %v1187, %v1186
      %v1198 = vpack.c.b16 %v1189, %v1188
      %v1199 = vpack.c.b16 %v1191, %v1190
      %1208 = vmatprep.subr.bf16.mxu0 0
      %1209 = vmatpush1.bf16.msra.mxu0 %v1192
      %1210 = vmatprep.subr.bf16.mxu0 0
      %1211 = vmatpush1.bf16.msra.mxu0 %v1193
      %1212 = vmatprep.subr.bf16.mxu0 0
      %1213 = vmatpush1.bf16.msra.mxu0 %v1194
      %1214 = vmatprep.subr.bf16.mxu0 0
      %1215 = vmatpush1.bf16.msra.mxu0 %v1195
      %1216 = vmatprep.subr.bf16.mxu0 0
      %1217 = vmatpush1.bf16.msra.mxu0 %v1196
      %1218 = vmatprep.subr.bf16.mxu0 0
      %1219 = vmatpush1.bf16.msra.mxu0 %v1197
      %1220 = vmatprep.subr.bf16.mxu0 0
      %1221 = vmatpush1.bf16.msra.mxu0 %v1198
      %1222 = vmatprep.subr.bf16.mxu0 0
      %1223 = vmatpush1.bf16.msra.mxu0 %v1199
      %1224 = vmatprep.subr.bf16.mxu0 0
      %1225 = vmatpush1.bf16.msra.mxu0 0
      %1226 = vmatprep.subr.bf16.mxu0 0
      %1227 = vmatpush1.bf16.msra.mxu0 0
      %1228 = vmatprep.subr.bf16.mxu0 0
      %1229 = vmatpush1.bf16.msra.mxu0 0
      %1230 = vmatprep.subr.bf16.mxu0 0
      %1231 = vmatpush1.bf16.msra.mxu0 0
      %1232 = vmatprep.subr.bf16.mxu0 0
      %1233 = vmatpush1.bf16.msra.mxu0 0
      %1234 = vmatprep.subr.bf16.mxu0 0
      %1235 = vmatpush1.bf16.msra.mxu0 0
      %1236 = vmatprep.subr.bf16.mxu0 0
      %1237 = vmatpush1.bf16.msra.mxu0 0
      %1238 = vmatprep.subr.bf16.mxu0 0
      %1239 = vmatpush1.bf16.msra.mxu0 0
      %1240 = vmatprep.mubr.bf16.mxu0 0
      %1241 = vmatmul.mubr.bf16.gmra.mrb[0].mxu0 %v1158
      %v1242 = vpop.f32.mrb[0].mxu0
      %v1243 = vadd.f32 0.0, %v1242
      %v1244 = vpop.f32.mrb[0].mxu0
      %v1245 = vpop.f32.mrb[0].mxu0
      %v1246 = vadd.f32 0.0, %v1245
      %v1247 = vpop.f32.mrb[0].mxu0
      %1248 = vdwg.mxu0
      %v1265 = vunpack.c.l.b16 %v1112
      %v1266 = vunpack.c.l.b16 %v1113
      %v1267 = vunpack.c.l.b16 %v1114
      %v1268 = vunpack.c.l.b16 %v1115
      %v1269 = vunpack.c.l.b16 %v1116
      %v1270 = vunpack.c.l.b16 %v1117
      %v1271 = vunpack.c.l.b16 %v1118
      %v1272 = vunpack.c.l.b16 %v1119
      %v1273 = vunpack.c.l.b16 %v1120
      %v1274 = vunpack.c.l.b16 %v1121
      %v1275 = vunpack.c.l.b16 %v1122
      %v1276 = vunpack.c.l.b16 %v1123
      %v1277 = vunpack.c.l.b16 %v1124
      %v1278 = vunpack.c.l.b16 %v1125
      %v1279 = vunpack.c.l.b16 %v1126
      %v1280 = vunpack.c.l.b16 %v1127
      %v1281 = vpack.c.b16 %v1266, %v1265
      %v1282 = vpack.c.b16 %v1268, %v1267
      %v1283 = vpack.c.b16 %v1270, %v1269
      %v1284 = vpack.c.b16 %v1272, %v1271
      %v1285 = vpack.c.b16 %v1274, %v1273
      %v1286 = vpack.c.b16 %v1276, %v1275
      %v1287 = vpack.c.b16 %v1278, %v1277
      %v1288 = vpack.c.b16 %v1280, %v1279
      %1297 = vmatprep.subr.bf16.mxu0 0
      %1298 = vmatpush1.bf16.msra.mxu0 %v1281
      %1299 = vmatprep.subr.bf16.mxu0 0
      %1300 = vmatpush1.bf16.msra.mxu0 %v1282
      %1301 = vmatprep.subr.bf16.mxu0 0
      %1302 = vmatpush1.bf16.msra.mxu0 %v1283
      %1303 = vmatprep.subr.bf16.mxu0 0
      %1304 = vmatpush1.bf16.msra.mxu0 %v1284
      %1305 = vmatprep.subr.bf16.mxu0 0
      %1306 = vmatpush1.bf16.msra.mxu0 %v1285
      %1307 = vmatprep.subr.bf16.mxu0 0
      %1308 = vmatpush1.bf16.msra.mxu0 %v1286
      %1309 = vmatprep.subr.bf16.mxu0 0
      %1310 = vmatpush1.bf16.msra.mxu0 %v1287
      %1311 = vmatprep.subr.bf16.mxu0 0
      %1312 = vmatpush1.bf16.msra.mxu0 %v1288
      %1313 = vmatprep.subr.bf16.mxu0 0
      %1314 = vmatpush1.bf16.msra.mxu0 0
      %1315 = vmatprep.subr.bf16.mxu0 0
      %1316 = vmatpush1.bf16.msra.mxu0 0
      %1317 = vmatprep.subr.bf16.mxu0 0
      %1318 = vmatpush1.bf16.msra.mxu0 0
      %1319 = vmatprep.subr.bf16.mxu0 0
      %1320 = vmatpush1.bf16.msra.mxu0 0
      %1321 = vmatprep.subr.bf16.mxu0 0
      %1322 = vmatpush1.bf16.msra.mxu0 0
      %1323 = vmatprep.subr.bf16.mxu0 0
      %1324 = vmatpush1.bf16.msra.mxu0 0
      %1325 = vmatprep.subr.bf16.mxu0 0
      %1326 = vmatpush1.bf16.msra.mxu0 0
      %1327 = vmatprep.subr.bf16.mxu0 0
      %1328 = vmatpush1.bf16.msra.mxu0 0
      %1329 = vmatprep.mubr.bf16.mxu0 0
      %1330 = vmatmul.mubr.bf16.gmra.mrb[0].mxu0 %v1111
      %v1331 = vpop.f32.mrb[0].mxu0
      %v1332 = vadd.f32 %v1243, %v1331
      %v1333 = vpop.f32.mrb[0].mxu0
      %v1334 = vpop.f32.mrb[0].mxu0
      %v1335 = vadd.f32 %v1246, %v1334
      %v1336 = vpop.f32.mrb[0].mxu0
      %1337 = vdwg.mxu0
      %v1338 = vld [vmem:[#allocation2] sm:$0xfe]
      %s1339 = scalar_lea.vmem %s5, 128
      %v1340 = vld [vmem:[%s1339] sm:$0xf]
      %v1341 = vld [vmem:[%s1339 + $0x4] sm:$0xf]
      %v1342 = vld [vmem:[%s1339 + $0x8] sm:$0xf]
      %v1343 = vld [vmem:[%s1339 + $0xc] sm:$0xf]
      %v1344 = vld [vmem:[%s1339 + $0x10] sm:$0xf]
      %v1345 = vld [vmem:[%s1339 + $0x14] sm:$0xf]
      %v1346 = vld [vmem:[%s1339 + $0x18] sm:$0xf]
      %v1347 = vld [vmem:[%s1339 + $0x1c] sm:$0xf]
      %v1348 = vld [vmem:[%s1339 + $0x20] sm:$0xf]
      %v1349 = vld [vmem:[%s1339 + $0x24] sm:$0xf]
      %v1350 = vld [vmem:[%s1339 + $0x28] sm:$0xf]
      %v1351 = vld [vmem:[%s1339 + $0x2c] sm:$0xf]
      %v1352 = vld [vmem:[%s1339 + $0x30] sm:$0xf]
      %v1353 = vld [vmem:[%s1339 + $0x34] sm:$0xf]
      %v1354 = vld [vmem:[%s1339 + $0x38] sm:$0xf]
      %v1355 = vld [vmem:[%s1339 + $0x3c] sm:$0xf]
      %v1358 = vrot.slane %v1338, 1
      %v1359 = vrot.slane %v1129, 1
      %v1360 = vsel %vm621, %v1358, %v1359
      %v1378 = vunpack.c.l.b16 %v1340
      %v1379 = vunpack.c.l.b16 %v1341
      %v1380 = vunpack.c.l.b16 %v1342
      %v1381 = vunpack.c.l.b16 %v1343
      %v1382 = vunpack.c.l.b16 %v1344
      %v1383 = vunpack.c.l.b16 %v1345
      %v1384 = vunpack.c.l.b16 %v1346
      %v1385 = vunpack.c.l.b16 %v1347
      %v1386 = vunpack.c.l.b16 %v1348
      %v1387 = vunpack.c.l.b16 %v1349
      %v1388 = vunpack.c.l.b16 %v1350
      %v1389 = vunpack.c.l.b16 %v1351
      %v1390 = vunpack.c.l.b16 %v1352
      %v1391 = vunpack.c.l.b16 %v1353
      %v1392 = vunpack.c.l.b16 %v1354
      %v1393 = vunpack.c.l.b16 %v1355
      %v1394 = vpack.c.b16 %v1379, %v1378
      %v1395 = vpack.c.b16 %v1381, %v1380
      %v1396 = vpack.c.b16 %v1383, %v1382
      %v1397 = vpack.c.b16 %v1385, %v1384
      %v1398 = vpack.c.b16 %v1387, %v1386
      %v1399 = vpack.c.b16 %v1389, %v1388
      %v1400 = vpack.c.b16 %v1391, %v1390
      %v1401 = vpack.c.b16 %v1393, %v1392
      %1410 = vmatprep.subr.bf16.mxu0 0
      %1411 = vmatpush1.bf16.msra.mxu0 %v1394
      %1412 = vmatprep.subr.bf16.mxu0 0
      %1413 = vmatpush1.bf16.msra.mxu0 %v1395
      %1414 = vmatprep.subr.bf16.mxu0 0
      %1415 = vmatpush1.bf16.msra.mxu0 %v1396
      %1416 = vmatprep.subr.bf16.mxu0 0
      %1417 = vmatpush1.bf16.msra.mxu0 %v1397
      %1418 = vmatprep.subr.bf16.mxu0 0
      %1419 = vmatpush1.bf16.msra.mxu0 %v1398
      %1420 = vmatprep.subr.bf16.mxu0 0
      %1421 = vmatpush1.bf16.msra.mxu0 %v1399
      %1422 = vmatprep.subr.bf16.mxu0 0
      %1423 = vmatpush1.bf16.msra.mxu0 %v1400
      %1424 = vmatprep.subr.bf16.mxu0 0
      %1425 = vmatpush1.bf16.msra.mxu0 %v1401
      %1426 = vmatprep.subr.bf16.mxu0 0
      %1427 = vmatpush1.bf16.msra.mxu0 0
      %1428 = vmatprep.subr.bf16.mxu0 0
      %1429 = vmatpush1.bf16.msra.mxu0 0
      %1430 = vmatprep.subr.bf16.mxu0 0
      %1431 = vmatpush1.bf16.msra.mxu0 0
      %1432 = vmatprep.subr.bf16.mxu0 0
      %1433 = vmatpush1.bf16.msra.mxu0 0
      %1434 = vmatprep.subr.bf16.mxu0 0
      %1435 = vmatpush1.bf16.msra.mxu0 0
      %1436 = vmatprep.subr.bf16.mxu0 0
      %1437 = vmatpush1.bf16.msra.mxu0 0
      %1438 = vmatprep.subr.bf16.mxu0 0
      %1439 = vmatpush1.bf16.msra.mxu0 0
      %1440 = vmatprep.subr.bf16.mxu0 0
      %1441 = vmatpush1.bf16.msra.mxu0 0
      %1442 = vmatprep.mubr.bf16.mxu0 0
      %1443 = vmatmul.mubr.bf16.gmra.mrb[0].mxu0 %v1360
      %v1444 = vpop.f32.mrb[0].mxu0
      %v1445 = vadd.f32 0.0, %v1444
      %v1446 = vpop.f32.mrb[0].mxu0
      %v1447 = vpop.f32.mrb[0].mxu0
      %v1448 = vadd.f32 0.0, %v1447
      %v1449 = vpop.f32.mrb[0].mxu0
      %1450 = vdwg.mxu0
      %v1451 = vadd.f32 %v1332, %v1445
      %v1452 = vadd.f32 %v1335, %v1448
      %v1453 = vld [vmem:[%s6] sm:$0x1]
      %v1455 = vlaneseq
      %v1456 = vshrl.u32 %v1455, 7
      %v1457 = vsub.s32 0, %v1456
      %v1458 = vrot.slane %v1453, %v1457
      %v1460 = vadd.f32 %v1451, %v1458
      %v1461 = vadd.f32 %v1452, %v1458
      %v1462 = vmax.f32 %v1460, 0.0
      %v1463 = vmax.f32 %v1461, 0.0
      %v1464 = vlaneseq
      %v1465 = vshrl.u32 %v1464, 7
      %v1466 = vlaneseq
      %v1467 = vand.u32 %v1466, 127
      %v1468 = vadd.s32 %v1467, 1
      %v1469 = vmul.u32 %v1465, 18
      %v1470 = vadd.s32 %v1469, 1
      %vm1471 = vcmp.ge.s32.totalorder %v1468, %v1470
      %v1472 = vadd.s32 %v1470, 15
      %vm1473 = vcmp.le.s32.totalorder %v1468, %v1472
      %vm1474 = vmand %vm1471, %vm1473
      %v1475 = vsel %vm1474, 1, 0
      %v1476 = vcvt.s32.f32 %v1475
      %v1477 = vpack.c.bf16 %v1476, %v1476
      %v1478 = vpack.c.bf16 %v1463, %v1462
      %vm1479 = vcmask 130048
      %v1481 = vsel %vm1479, %v1477, 0
      %1483 = vmatprep.subr.bf16.mxu0 0
      %1484 = vmatpush1.bf16.msra.mxu0 %v1478
      %1485 = vmatprep.subr.bf16.mxu0 0
      %1486 = vmatpush1.bf16.msra.mxu0 0
      %1487 = vmatprep.subr.bf16.mxu0 0
      %1488 = vmatpush1.bf16.msra.mxu0 0
      %1489 = vmatprep.subr.bf16.mxu0 0
      %1490 = vmatpush1.bf16.msra.mxu0 0
      %1491 = vmatprep.subr.bf16.mxu0 0
      %1492 = vmatpush1.bf16.msra.mxu0 0
      %1493 = vmatprep.subr.bf16.mxu0 0
      %1494 = vmatpush1.bf16.msra.mxu0 0
      %1495 = vmatprep.subr.bf16.mxu0 0
      %1496 = vmatpush1.bf16.msra.mxu0 0
      %1497 = vmatprep.subr.bf16.mxu0 0
      %1498 = vmatpush1.bf16.msra.mxu0 0
      %1499 = vmatprep.subr.bf16.mxu0 0
      %1500 = vmatpush1.bf16.msra.mxu0 0
      %1501 = vmatprep.subr.bf16.mxu0 0
      %1502 = vmatpush1.bf16.msra.mxu0 0
      %1503 = vmatprep.subr.bf16.mxu0 0
      %1504 = vmatpush1.bf16.msra.mxu0 0
      %1505 = vmatprep.subr.bf16.mxu0 0
      %1506 = vmatpush1.bf16.msra.mxu0 0
      %1507 = vmatprep.subr.bf16.mxu0 0
      %1508 = vmatpush1.bf16.msra.mxu0 0
      %1509 = vmatprep.subr.bf16.mxu0 0
      %1510 = vmatpush1.bf16.msra.mxu0 0
      %1511 = vmatprep.subr.bf16.mxu0 0
      %1512 = vmatpush1.bf16.msra.mxu0 0
      %1513 = vmatprep.subr.bf16.mxu0 0
      %1514 = vmatpush1.bf16.msra.mxu0 0
      %1515 = vmatprep.mubr.bf16.mxu0 0
      %1516 = vmatmul.mubr.bf16.gmra.mrb[0].mxu0 %v1481
      %v1517 = vpop.f32.mrb[0].mxu0
      %v1518 = vadd.f32 0.0, %v1517
      %v1519 = vpop.f32.mrb[0].mxu0
      %v1520 = vpop.f32.mrb[0].mxu0
      %v1521 = vpop.f32.mrb[0].mxu0
      %1522 = vdwg.mxu0
      %v1523 = vpack.c.bf16 %v1518, %v1518
      %v1524 = vld [vmem:[%s7] sm:$0xf]
      %v1525 = vld [vmem:[%s7 + $0x4] sm:$0xf]
      %v1526 = vld [vmem:[%s7 + $0x8] sm:$0xf]
      %v1527 = vld [vmem:[%s7 + $0xc] sm:$0xf]
      %v1528 = vld [vmem:[%s7 + $0x10] sm:$0xf]
      %v1529 = vld [vmem:[%s7 + $0x14] sm:$0xf]
      %v1530 = vld [vmem:[%s7 + $0x18] sm:$0xf]
      %v1531 = vld [vmem:[%s7 + $0x1c] sm:$0xf]
      %v1532 = vld [vmem:[%s7 + $0x20] sm:$0xf]
      %v1533 = vld [vmem:[%s7 + $0x24] sm:$0xf]
      %v1534 = vld [vmem:[%s7 + $0x28] sm:$0xf]
      %v1535 = vld [vmem:[%s7 + $0x2c] sm:$0xf]
      %v1536 = vld [vmem:[%s7 + $0x30] sm:$0xf]
      %v1537 = vld [vmem:[%s7 + $0x34] sm:$0xf]
      %v1538 = vld [vmem:[%s7 + $0x38] sm:$0xf]
      %v1539 = vld [vmem:[%s7 + $0x3c] sm:$0xf]
      %v1540 = vld [vmem:[%s8] sm:$0x1]
      %v1542 = vlaneseq
      %v1543 = vshrl.u32 %v1542, 7
      %v1544 = vsub.s32 0, %v1543
      %v1545 = vrot.slane %v1540, %v1544
      %v1563 = vunpack.c.l.b16 %v1524
      %v1564 = vunpack.c.l.b16 %v1525
      %v1565 = vunpack.c.l.b16 %v1526
      %v1566 = vunpack.c.l.b16 %v1527
      %v1567 = vunpack.c.l.b16 %v1528
      %v1568 = vunpack.c.l.b16 %v1529
      %v1569 = vunpack.c.l.b16 %v1530
      %v1570 = vunpack.c.l.b16 %v1531
      %v1571 = vunpack.c.l.b16 %v1532
      %v1572 = vunpack.c.l.b16 %v1533
      %v1573 = vunpack.c.l.b16 %v1534
      %v1574 = vunpack.c.l.b16 %v1535
      %v1575 = vunpack.c.l.b16 %v1536
      %v1576 = vunpack.c.l.b16 %v1537
      %v1577 = vunpack.c.l.b16 %v1538
      %v1578 = vunpack.c.l.b16 %v1539
      %v1579 = vpack.c.b16 %v1564, %v1563
      %v1580 = vpack.c.b16 %v1566, %v1565
      %v1581 = vpack.c.b16 %v1568, %v1567
      %v1582 = vpack.c.b16 %v1570, %v1569
      %v1583 = vpack.c.b16 %v1572, %v1571
      %v1584 = vpack.c.b16 %v1574, %v1573
      %v1585 = vpack.c.b16 %v1576, %v1575
      %v1586 = vpack.c.b16 %v1578, %v1577
      %1595 = vmatprep.subr.bf16.mxu0 0
      %1596 = vmatpush1.bf16.msra.mxu0 %v1579
      %1597 = vmatprep.subr.bf16.mxu0 0
      %1598 = vmatpush1.bf16.msra.mxu0 %v1580
      %1599 = vmatprep.subr.bf16.mxu0 0
      %1600 = vmatpush1.bf16.msra.mxu0 %v1581
      %1601 = vmatprep.subr.bf16.mxu0 0
      %1602 = vmatpush1.bf16.msra.mxu0 %v1582
      %1603 = vmatprep.subr.bf16.mxu0 0
      %1604 = vmatpush1.bf16.msra.mxu0 %v1583
      %1605 = vmatprep.subr.bf16.mxu0 0
      %1606 = vmatpush1.bf16.msra.mxu0 %v1584
      %1607 = vmatprep.subr.bf16.mxu0 0
      %1608 = vmatpush1.bf16.msra.mxu0 %v1585
      %1609 = vmatprep.subr.bf16.mxu0 0
      %1610 = vmatpush1.bf16.msra.mxu0 %v1586
      %1611 = vmatprep.subr.bf16.mxu0 0
      %1612 = vmatpush1.bf16.msra.mxu0 0
      %1613 = vmatprep.subr.bf16.mxu0 0
      %1614 = vmatpush1.bf16.msra.mxu0 0
      %1615 = vmatprep.subr.bf16.mxu0 0
      %1616 = vmatpush1.bf16.msra.mxu0 0
      %1617 = vmatprep.subr.bf16.mxu0 0
      %1618 = vmatpush1.bf16.msra.mxu0 0
      %1619 = vmatprep.subr.bf16.mxu0 0
      %1620 = vmatpush1.bf16.msra.mxu0 0
      %1621 = vmatprep.subr.bf16.mxu0 0
      %1622 = vmatpush1.bf16.msra.mxu0 0
      %1623 = vmatprep.subr.bf16.mxu0 0
      %1624 = vmatpush1.bf16.msra.mxu0 0
      %1625 = vmatprep.subr.bf16.mxu0 0
      %1626 = vmatpush1.bf16.msra.mxu0 0
      %1627 = vmatprep.mubr.bf16.mxu0 0
      %1628 = vmatmul.mubr.bf16.gmra.mrb[0].mxu0 %v1523
      %v1629 = vpop.f32.mrb[0].mxu0
      %v1630 = vadd.f32 %v1545, %v1629
      %v1631 = vpop.f32.mrb[0].mxu0
      %v1632 = vpop.f32.mrb[0].mxu0
      %v1633 = vpop.f32.mrb[0].mxu0
      %1634 = vdwg.mxu0
      %1635 = vst [vmem:[%s330] sm:$0xff] %v1630
      %p1636 = scmp.lt.s32.totalorder %s20, 1
      %s1637 = scalar_select %p1636, %s20, 1
      %s1638 = smul.addr %s1637, 8
      %s1639 = scalar_lea.vmem %s9, %s1638
      // Predicated region
      $region57: #{combined_model_forward.1} parent=55 // pred_check
        %p1640 = pneg %p232
      $region58: #{combined_model_forward.1} parent=55 // pred_check_branch
        %1642 = sbr.rel (%p1640) target = $region60
      $region59: #{combined_model_forward.1} parent=55 // pred_region
        _
      $region60: #{combined_model_forward.1} parent=55 // pred_fallthru
        _
    $region56: #{combined_model_forward.1} parent=5 // pred_fallthru
      _
    %p1643 = scmp.le.s32.totalorder 2, %s15
    // Predicated region
    $region61: #{combined_model_forward.1} parent=5 // pred_check
      %p1644 = pneg %p1643
    $region62: #{combined_model_forward.1} parent=5 // pred_check_branch
      %1646 = sbr.rel (%p1644) target = $region64
    $region63: #{combined_model_forward.1} parent=5 // pred_region
      %s1647 = ssub.s32 %s15, 2
      // Predicated region
      $region65: #{combined_model_forward.1} parent=63 // pred_check
        %p1648 = pneg %p238
      $region66: #{combined_model_forward.1} parent=63 // pred_check_branch
        %1650 = sbr.rel (%p1648) target = $region68
      $region67: #{combined_model_forward.1} parent=63 // pred_region
        %p1651 = scmp.lt.s32.totalorder %s21, 1
        %s1652 = scalar_select %p1651, %s21, 1
        %s1653 = smul.addr %s1652, 8
        %s1654 = scalar_lea.vmem %s9, %s1653
      $region68: #{combined_model_forward.1} parent=63 // pred_fallthru
        _
    $region64: #{combined_model_forward.1} parent=5 // pred_fallthru
      _
  $region6: #{combined_model_forward.1} parent=0 // loop_footer
    %s19 = sadd.s32 1, %s15
  $region7: #{combined_model_forward.1} parent=0 // loop_footer_branch
    %14 = sbr.rel target = $region3
  $region8: #{combined_model_forward.1} parent=0 // loop_exit
    _

</llo_original>
